<compile_context>
chip_gen: v7x
topology: tpu7x:2x2x1
jax: 0.10.0
libtpu: 0.0.40
codegen_flags: <defaults>
</compile_context>

<pallas_src>
import jax
import jax.numpy as jnp
from jax import lax
from jax.experimental import pallas as pl
from jax.experimental.pallas import tpu as pltpu


def _sigmoid(x):
    return 1.0 / (1.0 + jnp.exp(-x))


def _dsn_kernel(x_ref, wi_f_ref, wh_f_ref, b_f_ref,
                wi_b_ref, wh_b_ref, b_b_ref,
                wfc_f_ref, wfc_b_ref, bfc_ref,
                o_ref,
                xg_f, xg_b, hs_f, hs_b, hc, cc):
    """One batch element (one sequence) per grid step.

    x_ref   : (1, T, D)   input sequence
    wi_*    : (D, 4H)     input->gate weights, gate order (i, f, g, o)
    wh_*    : (H, 4H)     hidden->gate weights
    b_*     : (1, 4H)     combined bias (b_ih + b_hh)
    wfc_*   : (H, 1)      fc weight split per direction
    bfc_ref : (1, 1)      fc bias
    o_ref   : (1, T, 1)   sigmoid(fc(h)) output
    xg_*    : (T, 4H)     scratch: input-gate pre-activations for all timesteps
    hs_*    : (T, H)      scratch: per-timestep hidden states per direction
    hc, cc  : (1, H)      scratch: recurrent h / c carries
    """
    T = x_ref.shape[1]
    H = wh_f_ref.shape[0]

    x = x_ref[0]  # (T, D)

    # Fused input projections for all timesteps: one big MXU matmul per direction.
    xg_f[...] = jnp.dot(x, wi_f_ref[...], preferred_element_type=jnp.float32) + b_f_ref[...]
    xg_b[...] = jnp.dot(x, wi_b_ref[...], preferred_element_type=jnp.float32) + b_b_ref[...]

    def run_direction(xg_ref, wh_ref, hs_ref, reverse):
        wh = wh_ref[...]                      # (H, 4H), hoisted out of the loop
        hc[...] = jnp.zeros((1, H), jnp.float32)
        cc[...] = jnp.zeros((1, H), jnp.float32)

        def body(step, carry):
            t = (T - 1 - step) if reverse else step
            h = hc[...]
            c = cc[...]
            g = xg_ref[pl.ds(t, 1), :] + jnp.dot(
                h, wh, preferred_element_type=jnp.float32)        # (1, 4H)
            i_g = _sigmoid(g[:, 0:H])
            f_g = _sigmoid(g[:, H:2 * H])
            g_g = jnp.tanh(g[:, 2 * H:3 * H])
            o_g = _sigmoid(g[:, 3 * H:4 * H])
            c_new = f_g * c + i_g * g_g
            h_new = o_g * jnp.tanh(c_new)
            cc[...] = c_new
            hc[...] = h_new
            hs_ref[pl.ds(t, 1), :] = h_new
            return carry

        lax.fori_loop(0, T, body, 0)

    run_direction(xg_f, wh_f_ref, hs_f, reverse=False)
    run_direction(xg_b, wh_b_ref, hs_b, reverse=True)

    # Fused Linear + sigmoid over all timesteps (one matmul per direction).
    logit = (jnp.dot(hs_f[...], wfc_f_ref[...], preferred_element_type=jnp.float32)
             + jnp.dot(hs_b[...], wfc_b_ref[...], preferred_element_type=jnp.float32)
             + bfc_ref[...])                                      # (T, 1)
    o_ref[0] = _sigmoid(logit).astype(o_ref.dtype)


def dsn_forward(x, params):
    """x: (B, T, D) float32. params: PyTorch-layout LSTM/fc parameters.

    Returns p: (B, T, 1) = sigmoid(Linear(BiLSTM(x))), matching DSN.forward.
    """
    B, T, D = x.shape
    H = params["w_hh_f"].shape[1]

    # PyTorch layout -> matmul-friendly layout (done once in plain JAX glue).
    wi_f = params["w_ih_f"].T                                   # (D, 4H)
    wh_f = params["w_hh_f"].T                                   # (H, 4H)
    b_f = (params["b_ih_f"] + params["b_hh_f"]).reshape(1, 4 * H)
    wi_b = params["w_ih_b"].T
    wh_b = params["w_hh_b"].T
    b_b = (params["b_ih_b"] + params["b_hh_b"]).reshape(1, 4 * H)
    wfc_f = params["fc_w"][:, :H].T                             # (H, 1)
    wfc_b = params["fc_w"][:, H:].T                             # (H, 1)
    bfc = params["fc_b"].reshape(1, 1)

    return pl.pallas_call(
        _dsn_kernel,
        out_shape=jax.ShapeDtypeStruct((B, T, 1), x.dtype),
        grid_spec=pltpu.PrefetchScalarGridSpec(
            num_scalar_prefetch=0,
            grid=(B,),
            in_specs=[
                pl.BlockSpec((1, T, D), lambda b: (b, 0, 0)),
                pl.BlockSpec((D, 4 * H), lambda b: (0, 0)),
                pl.BlockSpec((H, 4 * H), lambda b: (0, 0)),
                pl.BlockSpec((1, 4 * H), lambda b: (0, 0)),
                pl.BlockSpec((D, 4 * H), lambda b: (0, 0)),
                pl.BlockSpec((H, 4 * H), lambda b: (0, 0)),
                pl.BlockSpec((1, 4 * H), lambda b: (0, 0)),
                pl.BlockSpec((H, 1), lambda b: (0, 0)),
                pl.BlockSpec((H, 1), lambda b: (0, 0)),
                pl.BlockSpec((1, 1), lambda b: (0, 0)),
            ],
            out_specs=pl.BlockSpec((1, T, 1), lambda b: (b, 0, 0)),
            scratch_shapes=[
                pltpu.VMEM((T, 4 * H), jnp.float32),   # xg_f
                pltpu.VMEM((T, 4 * H), jnp.float32),   # xg_b
                pltpu.VMEM((T, H), jnp.float32),       # hs_f
                pltpu.VMEM((T, H), jnp.float32),       # hs_b
                pltpu.VMEM((1, H), jnp.float32),       # h carry
                pltpu.VMEM((1, H), jnp.float32),       # c carry
            ],
        ),
        compiler_params=pltpu.CompilerParams(
            dimension_semantics=("parallel",)),
    )(x, wi_f, wh_f, b_f, wi_b, wh_b, b_b, wfc_f, wfc_b, bfc)


def _reference(x, params):
    """Pure-JAX reference with identical semantics to the PyTorch DSN forward."""
    H = params["w_hh_f"].shape[1]
    hp = jax.lax.Precision.HIGHEST

    def run(x_seq, w_ih, w_hh, b_ih, b_hh):
        B = x_seq.shape[0]

        def step(carry, xt):
            h, c = carry
            g = (jnp.dot(xt, w_ih.T, precision=hp)
                 + jnp.dot(h, w_hh.T, precision=hp) + b_ih + b_hh)
            i = _sigmoid(g[:, 0:H])
            f = _sigmoid(g[:, H:2 * H])
            gg = jnp.tanh(g[:, 2 * H:3 * H])
            o = _sigmoid(g[:, 3 * H:4 * H])
            c = f * c + i * gg
            h = o * jnp.tanh(c)
            return (h, c), h

        init = (jnp.zeros((B, H), x_seq.dtype), jnp.zeros((B, H), x_seq.dtype))
        _, hs = jax.lax.scan(step, init, jnp.swapaxes(x_seq, 0, 1))
        return jnp.swapaxes(hs, 0, 1)                            # (B, T, H)

    hf = run(x, params["w_ih_f"], params["w_hh_f"], params["b_ih_f"], params["b_hh_f"])
    hb = run(x[:, ::-1], params["w_ih_b"], params["w_hh_b"],
             params["b_ih_b"], params["b_hh_b"])[:, ::-1]
    h = jnp.concatenate([hf, hb], axis=-1)                       # (B, T, 2H)
    logit = jnp.dot(h, params["fc_w"].T, precision=hp) + params["fc_b"]
    return _sigmoid(logit)                                       # (B, T, 1)


if __name__ == "__main__":
    # Small shapes consistent with the module: batch=2, seq=8, in_dim=128, hid_dim=32.
    # TODO(synk): only the default cell='lstm' path of DSN is implemented (gru/rnn variants omitted).
    B, T, D, H = 2, 8, 128, 32

    key = jax.random.PRNGKey(0)
    ks = jax.random.split(key, 11)
    s = 0.1
    params = {
        "w_ih_f": s * jax.random.normal(ks[0], (4 * H, D), jnp.float32),
        "w_hh_f": s * jax.random.normal(ks[1], (4 * H, H), jnp.float32),
        "b_ih_f": s * jax.random.normal(ks[2], (4 * H,), jnp.float32),
        "b_hh_f": s * jax.random.normal(ks[3], (4 * H,), jnp.float32),
        "w_ih_b": s * jax.random.normal(ks[4], (4 * H, D), jnp.float32),
        "w_hh_b": s * jax.random.normal(ks[5], (4 * H, H), jnp.float32),
        "b_ih_b": s * jax.random.normal(ks[6], (4 * H,), jnp.float32),
        "b_hh_b": s * jax.random.normal(ks[7], (4 * H,), jnp.float32),
        "fc_w":   s * jax.random.normal(ks[8], (1, 2 * H), jnp.float32),
        "fc_b":   s * jax.random.normal(ks[9], (1,), jnp.float32),
    }
    x = jax.random.normal(ks[10], (B, T, D), dtype=jnp.float32)

    out = jax.block_until_ready(dsn_forward(x, params))
    ref = jax.block_until_ready(_reference(x, params))

    assert out.shape == (B, T, 1), out.shape
    assert jnp.allclose(out, ref, atol=1e-3, rtol=1e-3), float(jnp.max(jnp.abs(out - ref)))
    print("KERNEL_OK")
</pallas_src>

<mosaic_0001>
module attributes {stable_mosaic.version = 11 : i64} {
  func.func @_dsn_kernel(%arg0: i32, %arg1: memref<1x8x128xf32, #tpu.memory_space<vmem>>, %arg2: memref<128x128xf32, #tpu.memory_space<vmem>>, %arg3: memref<32x128xf32, #tpu.memory_space<vmem>>, %arg4: memref<1x128xf32, #tpu.memory_space<vmem>>, %arg5: memref<128x128xf32, #tpu.memory_space<vmem>>, %arg6: memref<32x128xf32, #tpu.memory_space<vmem>>, %arg7: memref<1x128xf32, #tpu.memory_space<vmem>>, %arg8: memref<32x1xf32, #tpu.memory_space<vmem>>, %arg9: memref<32x1xf32, #tpu.memory_space<vmem>>, %arg10: memref<1x1xf32, #tpu.memory_space<vmem>>, %arg11: memref<1x8x1xf32, #tpu.memory_space<vmem>>, %arg12: memref<8x128xf32, #tpu.memory_space<vmem>>, %arg13: memref<8x128xf32, #tpu.memory_space<vmem>>, %arg14: memref<8x32xf32, #tpu.memory_space<vmem>>, %arg15: memref<8x32xf32, #tpu.memory_space<vmem>>, %arg16: memref<1x32xf32, #tpu.memory_space<vmem>>, %arg17: memref<1x32xf32, #tpu.memory_space<vmem>>) attributes {dimension_semantics = [#tpu.dimension_semantics<parallel>], iteration_bounds = array<i64: 2>, scalar_prefetch = 0 : i64, scratch_operands = 6 : i64, tpu.core_type = #tpu.core_type<tc>, window_params = [{transform_indices = @transform_0, window_bounds = array<i64: 1, 8, 128>}, {pipeline_mode = #tpu.pipeline_mode<synchronous>, transform_indices = @transform_1, window_bounds = array<i64: 128, 128>}, {pipeline_mode = #tpu.pipeline_mode<synchronous>, transform_indices = @transform_2, window_bounds = array<i64: 32, 128>}, {pipeline_mode = #tpu.pipeline_mode<synchronous>, transform_indices = @transform_3, window_bounds = array<i64: 1, 128>}, {pipeline_mode = #tpu.pipeline_mode<synchronous>, transform_indices = @transform_4, window_bounds = array<i64: 128, 128>}, {pipeline_mode = #tpu.pipeline_mode<synchronous>, transform_indices = @transform_5, window_bounds = array<i64: 32, 128>}, {pipeline_mode = #tpu.pipeline_mode<synchronous>, transform_indices = @transform_6, window_bounds = array<i64: 1, 128>}, {pipeline_mode = #tpu.pipeline_mode<synchronous>, transform_indices = @transform_7, window_bounds = array<i64: 32, 1>}, {pipeline_mode = #tpu.pipeline_mode<synchronous>, transform_indices = @transform_8, window_bounds = array<i64: 32, 1>}, {pipeline_mode = #tpu.pipeline_mode<synchronous>, transform_indices = @transform_9, window_bounds = array<i64: 1, 1>}, {transform_indices = @transform_10, window_bounds = array<i64: 1, 8, 1>}]} {
    %c0 = arith.constant 0 : index
    %c0_0 = arith.constant 0 : index
    %c0_1 = arith.constant 0 : index
    %0 = vector.load %arg1[%c0, %c0_0, %c0_1] : memref<1x8x128xf32, #tpu.memory_space<vmem>>, vector<1x8x128xf32>
    %1 = vector.shape_cast %0 : vector<1x8x128xf32> to vector<8x128xf32>
    %c0_2 = arith.constant 0 : index
    %c0_3 = arith.constant 0 : index
    %2 = vector.load %arg2[%c0_2, %c0_3] : memref<128x128xf32, #tpu.memory_space<vmem>>, vector<128x128xf32>
    %cst = arith.constant dense<0.000000e+00> : vector<8x128xf32>
    %3 = tpu.matmul %1, %2, %cst {dimension_numbers = #tpu.dot_dimension_numbers<[1], [0], [0], [1], [0, 0, 1, 1], [], []>} : vector<8x128xf32>, vector<128x128xf32>, vector<8x128xf32> -> vector<8x128xf32>
    %c0_4 = arith.constant 0 : index
    %c0_5 = arith.constant 0 : index
    %4 = vector.load %arg4[%c0_4, %c0_5] : memref<1x128xf32, #tpu.memory_space<vmem>>, vector<1x128xf32>
    %5 = vector.broadcast %4 : vector<1x128xf32> to vector<8x128xf32>
    %6 = arith.addf %3, %5 : vector<8x128xf32>
    %c0_6 = arith.constant 0 : index
    %c0_7 = arith.constant 0 : index
    %7 = vector.load %arg12[%c0_6, %c0_7] : memref<8x128xf32, #tpu.memory_space<vmem>>, vector<8x128xf32>
    tpu.vector_store %arg12[%c0_6, %c0_7], %6 {strides = array<i32>} : memref<8x128xf32, #tpu.memory_space<vmem>>, vector<8x128xf32>,
    %c0_8 = arith.constant 0 : index
    %c0_9 = arith.constant 0 : index
    %8 = vector.load %arg5[%c0_8, %c0_9] : memref<128x128xf32, #tpu.memory_space<vmem>>, vector<128x128xf32>
    %cst_10 = arith.constant dense<0.000000e+00> : vector<8x128xf32>
    %9 = tpu.matmul %1, %8, %cst_10 {dimension_numbers = #tpu.dot_dimension_numbers<[1], [0], [0], [1], [0, 0, 1, 1], [], []>} : vector<8x128xf32>, vector<128x128xf32>, vector<8x128xf32> -> vector<8x128xf32>
    %c0_11 = arith.constant 0 : index
    %c0_12 = arith.constant 0 : index
    %10 = vector.load %arg7[%c0_11, %c0_12] : memref<1x128xf32, #tpu.memory_space<vmem>>, vector<1x128xf32>
    %11 = vector.broadcast %10 : vector<1x128xf32> to vector<8x128xf32>
    %12 = arith.addf %9, %11 : vector<8x128xf32>
    %c0_13 = arith.constant 0 : index
    %c0_14 = arith.constant 0 : index
    %13 = vector.load %arg13[%c0_13, %c0_14] : memref<8x128xf32, #tpu.memory_space<vmem>>, vector<8x128xf32>
    tpu.vector_store %arg13[%c0_13, %c0_14], %12 {strides = array<i32>} : memref<8x128xf32, #tpu.memory_space<vmem>>, vector<8x128xf32>,
    %c0_15 = arith.constant 0 : index
    %c0_16 = arith.constant 0 : index
    %14 = vector.load %arg3[%c0_15, %c0_16] : memref<32x128xf32, #tpu.memory_space<vmem>>, vector<32x128xf32>
    %cst_17 = arith.constant 0.000000e+00 : f32
    %15 = vector.broadcast %cst_17 : f32 to vector<1x32xf32>
    %c0_18 = arith.constant 0 : index
    %c0_19 = arith.constant 0 : index
    %16 = vector.load %arg16[%c0_18, %c0_19] : memref<1x32xf32, #tpu.memory_space<vmem>>, vector<1x32xf32>
    tpu.vector_store %arg16[%c0_18, %c0_19], %15 {strides = array<i32>} : memref<1x32xf32, #tpu.memory_space<vmem>>, vector<1x32xf32>,
    %cst_20 = arith.constant 0.000000e+00 : f32
    %17 = vector.broadcast %cst_20 : f32 to vector<1x32xf32>
    %c0_21 = arith.constant 0 : index
    %c0_22 = arith.constant 0 : index
    %18 = vector.load %arg17[%c0_21, %c0_22] : memref<1x32xf32, #tpu.memory_space<vmem>>, vector<1x32xf32>
    tpu.vector_store %arg17[%c0_21, %c0_22], %17 {strides = array<i32>} : memref<1x32xf32, #tpu.memory_space<vmem>>, vector<1x32xf32>,
    %c0_i32 = arith.constant 0 : i32
    %c8_i32 = arith.constant 8 : i32
    %19 = arith.addi %c0_i32, %c8_i32 : i32
    %c1_i32 = arith.constant 1 : i32
    scf.for %arg18 = %c0_i32 to %19 step %c1_i32  : i32 {
      %c0_54 = arith.constant 0 : index
      %c0_55 = arith.constant 0 : index
      %46 = vector.load %arg16[%c0_54, %c0_55] : memref<1x32xf32, #tpu.memory_space<vmem>>, vector<1x32xf32>
      %c0_56 = arith.constant 0 : index
      %c0_57 = arith.constant 0 : index
      %47 = vector.load %arg17[%c0_56, %c0_57] : memref<1x32xf32, #tpu.memory_space<vmem>>, vector<1x32xf32>
      %48 = arith.index_cast %arg18 : i32 to index
      %c0_58 = arith.constant 0 : index
      %49 = vector.load %arg12[%48, %c0_58] : memref<8x128xf32, #tpu.memory_space<vmem>>, vector<1x128xf32>
      %cst_59 = arith.constant dense<0.000000e+00> : vector<1x128xf32>
      %50 = tpu.matmul %46, %14, %cst_59 {dimension_numbers = #tpu.dot_dimension_numbers<[1], [0], [0], [1], [0, 0, 1, 1], [], []>} : vector<1x32xf32>, vector<32x128xf32>, vector<1x128xf32> -> vector<1x128xf32>
      %51 = arith.addf %49, %50 : vector<1x128xf32>
      %52 = vector.extract_strided_slice %51 {offsets = [0, 0], sizes = [1, 32], strides = [1, 1]} : vector<1x128xf32> to vector<1x32xf32>
      %cst_60 = arith.constant 0.000000e+00 : f32
      %53 = vector.broadcast %cst_60 : f32 to vector<1x32xf32>
      %54 = arith.subf %53, %52 : vector<1x32xf32>
      %55 = math.exp %54 : vector<1x32xf32>
      %cst_61 = arith.constant 1.000000e+00 : f32
      %56 = vector.broadcast %cst_61 : f32 to vector<1x32xf32>
      %57 = arith.addf %56, %55 : vector<1x32xf32>
      %cst_62 = arith.constant 1.000000e+00 : f32
      %58 = vector.broadcast %cst_62 : f32 to vector<1x32xf32>
      %59 = arith.divf %58, %57 : vector<1x32xf32>
      %60 = vector.extract_strided_slice %51 {offsets = [0, 32], sizes = [1, 32], strides = [1, 1]} : vector<1x128xf32> to vector<1x32xf32>
      %cst_63 = arith.constant 0.000000e+00 : f32
      %61 = vector.broadcast %cst_63 : f32 to vector<1x32xf32>
      %62 = arith.subf %61, %60 : vector<1x32xf32>
      %63 = math.exp %62 : vector<1x32xf32>
      %cst_64 = arith.constant 1.000000e+00 : f32
      %64 = vector.broadcast %cst_64 : f32 to vector<1x32xf32>
      %65 = arith.addf %64, %63 : vector<1x32xf32>
      %cst_65 = arith.constant 1.000000e+00 : f32
      %66 = vector.broadcast %cst_65 : f32 to vector<1x32xf32>
      %67 = arith.divf %66, %65 : vector<1x32xf32>
      %68 = vector.extract_strided_slice %51 {offsets = [0, 64], sizes = [1, 32], strides = [1, 1]} : vector<1x128xf32> to vector<1x32xf32>
      %69 = math.tanh %68 : vector<1x32xf32>
      %70 = vector.extract_strided_slice %51 {offsets = [0, 96], sizes = [1, 32], strides = [1, 1]} : vector<1x128xf32> to vector<1x32xf32>
      %cst_66 = arith.constant 0.000000e+00 : f32
      %71 = vector.broadcast %cst_66 : f32 to vector<1x32xf32>
      %72 = arith.subf %71, %70 : vector<1x32xf32>
      %73 = math.exp %72 : vector<1x32xf32>
      %cst_67 = arith.constant 1.000000e+00 : f32
      %74 = vector.broadcast %cst_67 : f32 to vector<1x32xf32>
      %75 = arith.addf %74, %73 : vector<1x32xf32>
      %cst_68 = arith.constant 1.000000e+00 : f32
      %76 = vector.broadcast %cst_68 : f32 to vector<1x32xf32>
      %77 = arith.divf %76, %75 : vector<1x32xf32>
      %78 = arith.mulf %67, %47 : vector<1x32xf32>
      %79 = arith.mulf %59, %69 : vector<1x32xf32>
      %80 = arith.addf %78, %79 : vector<1x32xf32>
      %81 = math.tanh %80 : vector<1x32xf32>
      %82 = arith.mulf %77, %81 : vector<1x32xf32>
      %c0_69 = arith.constant 0 : index
      %c0_70 = arith.constant 0 : index
      %83 = vector.load %arg17[%c0_69, %c0_70] : memref<1x32xf32, #tpu.memory_space<vmem>>, vector<1x32xf32>
      tpu.vector_store %arg17[%c0_69, %c0_70], %80 {strides = array<i32>} : memref<1x32xf32, #tpu.memory_space<vmem>>, vector<1x32xf32>,
      %c0_71 = arith.constant 0 : index
      %c0_72 = arith.constant 0 : index
      %84 = vector.load %arg16[%c0_71, %c0_72] : memref<1x32xf32, #tpu.memory_space<vmem>>, vector<1x32xf32>
      tpu.vector_store %arg16[%c0_71, %c0_72], %82 {strides = array<i32>} : memref<1x32xf32, #tpu.memory_space<vmem>>, vector<1x32xf32>,
      %85 = arith.index_cast %arg18 : i32 to index
      %c0_73 = arith.constant 0 : index
      %86 = vector.load %arg14[%85, %c0_73] : memref<8x32xf32, #tpu.memory_space<vmem>>, vector<1x32xf32>
      tpu.vector_store %arg14[%85, %c0_73], %82 {strides = array<i32>} : memref<8x32xf32, #tpu.memory_space<vmem>>, vector<1x32xf32>,
    }
    %c8_i32_23 = arith.constant 8 : i32
    %c0_24 = arith.constant 0 : index
    %c0_25 = arith.constant 0 : index
    %20 = vector.load %arg6[%c0_24, %c0_25] : memref<32x128xf32, #tpu.memory_space<vmem>>, vector<32x128xf32>
    %cst_26 = arith.constant 0.000000e+00 : f32
    %21 = vector.broadcast %cst_26 : f32 to vector<1x32xf32>
    %c0_27 = arith.constant 0 : index
    %c0_28 = arith.constant 0 : index
    %22 = vector.load %arg16[%c0_27, %c0_28] : memref<1x32xf32, #tpu.memory_space<vmem>>, vector<1x32xf32>
    tpu.vector_store %arg16[%c0_27, %c0_28], %21 {strides = array<i32>} : memref<1x32xf32, #tpu.memory_space<vmem>>, vector<1x32xf32>,
    %cst_29 = arith.constant 0.000000e+00 : f32
    %23 = vector.broadcast %cst_29 : f32 to vector<1x32xf32>
    %c0_30 = arith.constant 0 : index
    %c0_31 = arith.constant 0 : index
    %24 = vector.load %arg17[%c0_30, %c0_31] : memref<1x32xf32, #tpu.memory_space<vmem>>, vector<1x32xf32>
    tpu.vector_store %arg17[%c0_30, %c0_31], %23 {strides = array<i32>} : memref<1x32xf32, #tpu.memory_space<vmem>>, vector<1x32xf32>,
    %c0_i32_32 = arith.constant 0 : i32
    %c8_i32_33 = arith.constant 8 : i32
    %25 = arith.addi %c0_i32_32, %c8_i32_33 : i32
    %c1_i32_34 = arith.constant 1 : i32
    scf.for %arg18 = %c0_i32_32 to %25 step %c1_i32_34  : i32 {
      %c7_i32 = arith.constant 7 : i32
      %46 = arith.subi %c7_i32, %arg18 : i32
      %c0_54 = arith.constant 0 : index
      %c0_55 = arith.constant 0 : index
      %47 = vector.load %arg16[%c0_54, %c0_55] : memref<1x32xf32, #tpu.memory_space<vmem>>, vector<1x32xf32>
      %c0_56 = arith.constant 0 : index
      %c0_57 = arith.constant 0 : index
      %48 = vector.load %arg17[%c0_56, %c0_57] : memref<1x32xf32, #tpu.memory_space<vmem>>, vector<1x32xf32>
      %49 = arith.index_cast %46 : i32 to index
      %c0_58 = arith.constant 0 : index
      %50 = vector.load %arg13[%49, %c0_58] : memref<8x128xf32, #tpu.memory_space<vmem>>, vector<1x128xf32>
      %cst_59 = arith.constant dense<0.000000e+00> : vector<1x128xf32>
      %51 = tpu.matmul %47, %20, %cst_59 {dimension_numbers = #tpu.dot_dimension_numbers<[1], [0], [0], [1], [0, 0, 1, 1], [], []>} : vector<1x32xf32>, vector<32x128xf32>, vector<1x128xf32> -> vector<1x128xf32>
      %52 = arith.addf %50, %51 : vector<1x128xf32>
      %53 = vector.extract_strided_slice %52 {offsets = [0, 0], sizes = [1, 32], strides = [1, 1]} : vector<1x128xf32> to vector<1x32xf32>
      %cst_60 = arith.constant 0.000000e+00 : f32
      %54 = vector.broadcast %cst_60 : f32 to vector<1x32xf32>
      %55 = arith.subf %54, %53 : vector<1x32xf32>
      %56 = math.exp %55 : vector<1x32xf32>
      %cst_61 = arith.constant 1.000000e+00 : f32
      %57 = vector.broadcast %cst_61 : f32 to vector<1x32xf32>
      %58 = arith.addf %57, %56 : vector<1x32xf32>
      %cst_62 = arith.constant 1.000000e+00 : f32
      %59 = vector.broadcast %cst_62 : f32 to vector<1x32xf32>
      %60 = arith.divf %59, %58 : vector<1x32xf32>
      %61 = vector.extract_strided_slice %52 {offsets = [0, 32], sizes = [1, 32], strides = [1, 1]} : vector<1x128xf32> to vector<1x32xf32>
      %cst_63 = arith.constant 0.000000e+00 : f32
      %62 = vector.broadcast %cst_63 : f32 to vector<1x32xf32>
      %63 = arith.subf %62, %61 : vector<1x32xf32>
      %64 = math.exp %63 : vector<1x32xf32>
      %cst_64 = arith.constant 1.000000e+00 : f32
      %65 = vector.broadcast %cst_64 : f32 to vector<1x32xf32>
      %66 = arith.addf %65, %64 : vector<1x32xf32>
      %cst_65 = arith.constant 1.000000e+00 : f32
      %67 = vector.broadcast %cst_65 : f32 to vector<1x32xf32>
      %68 = arith.divf %67, %66 : vector<1x32xf32>
      %69 = vector.extract_strided_slice %52 {offsets = [0, 64], sizes = [1, 32], strides = [1, 1]} : vector<1x128xf32> to vector<1x32xf32>
      %70 = math.tanh %69 : vector<1x32xf32>
      %71 = vector.extract_strided_slice %52 {offsets = [0, 96], sizes = [1, 32], strides = [1, 1]} : vector<1x128xf32> to vector<1x32xf32>
      %cst_66 = arith.constant 0.000000e+00 : f32
      %72 = vector.broadcast %cst_66 : f32 to vector<1x32xf32>
      %73 = arith.subf %72, %71 : vector<1x32xf32>
      %74 = math.exp %73 : vector<1x32xf32>
      %cst_67 = arith.constant 1.000000e+00 : f32
      %75 = vector.broadcast %cst_67 : f32 to vector<1x32xf32>
      %76 = arith.addf %75, %74 : vector<1x32xf32>
      %cst_68 = arith.constant 1.000000e+00 : f32
      %77 = vector.broadcast %cst_68 : f32 to vector<1x32xf32>
      %78 = arith.divf %77, %76 : vector<1x32xf32>
      %79 = arith.mulf %68, %48 : vector<1x32xf32>
      %80 = arith.mulf %60, %70 : vector<1x32xf32>
      %81 = arith.addf %79, %80 : vector<1x32xf32>
      %82 = math.tanh %81 : vector<1x32xf32>
      %83 = arith.mulf %78, %82 : vector<1x32xf32>
      %c0_69 = arith.constant 0 : index
      %c0_70 = arith.constant 0 : index
      %84 = vector.load %arg17[%c0_69, %c0_70] : memref<1x32xf32, #tpu.memory_space<vmem>>, vector<1x32xf32>
      tpu.vector_store %arg17[%c0_69, %c0_70], %81 {strides = array<i32>} : memref<1x32xf32, #tpu.memory_space<vmem>>, vector<1x32xf32>,
      %c0_71 = arith.constant 0 : index
      %c0_72 = arith.constant 0 : index
      %85 = vector.load %arg16[%c0_71, %c0_72] : memref<1x32xf32, #tpu.memory_space<vmem>>, vector<1x32xf32>
      tpu.vector_store %arg16[%c0_71, %c0_72], %83 {strides = array<i32>} : memref<1x32xf32, #tpu.memory_space<vmem>>, vector<1x32xf32>,
      %86 = arith.index_cast %46 : i32 to index
      %c0_73 = arith.constant 0 : index
      %87 = vector.load %arg15[%86, %c0_73] : memref<8x32xf32, #tpu.memory_space<vmem>>, vector<1x32xf32>
      tpu.vector_store %arg15[%86, %c0_73], %83 {strides = array<i32>} : memref<8x32xf32, #tpu.memory_space<vmem>>, vector<1x32xf32>,
    }
    %c8_i32_35 = arith.constant 8 : i32
    %c0_36 = arith.constant 0 : index
    %c0_37 = arith.constant 0 : index
    %26 = vector.load %arg14[%c0_36, %c0_37] : memref<8x32xf32, #tpu.memory_space<vmem>>, vector<8x32xf32>
    %c0_38 = arith.constant 0 : index
    %c0_39 = arith.constant 0 : index
    %27 = vector.load %arg8[%c0_38, %c0_39] : memref<32x1xf32, #tpu.memory_space<vmem>>, vector<32x1xf32>
    %cst_40 = arith.constant dense<0.000000e+00> : vector<8x1xf32>
    %28 = tpu.matmul %26, %27, %cst_40 {dimension_numbers = #tpu.dot_dimension_numbers<[1], [0], [0], [1], [0, 0, 1, 1], [], []>} : vector<8x32xf32>, vector<32x1xf32>, vector<8x1xf32> -> vector<8x1xf32>
    %c0_41 = arith.constant 0 : index
    %c0_42 = arith.constant 0 : index
    %29 = vector.load %arg15[%c0_41, %c0_42] : memref<8x32xf32, #tpu.memory_space<vmem>>, vector<8x32xf32>
    %c0_43 = arith.constant 0 : index
    %c0_44 = arith.constant 0 : index
    %30 = vector.load %arg9[%c0_43, %c0_44] : memref<32x1xf32, #tpu.memory_space<vmem>>, vector<32x1xf32>
    %cst_45 = arith.constant dense<0.000000e+00> : vector<8x1xf32>
    %31 = tpu.matmul %29, %30, %cst_45 {dimension_numbers = #tpu.dot_dimension_numbers<[1], [0], [0], [1], [0, 0, 1, 1], [], []>} : vector<8x32xf32>, vector<32x1xf32>, vector<8x1xf32> -> vector<8x1xf32>
    %32 = arith.addf %28, %31 : vector<8x1xf32>
    %c0_46 = arith.constant 0 : index
    %c0_47 = arith.constant 0 : index
    %33 = vector.load %arg10[%c0_46, %c0_47] : memref<1x1xf32, #tpu.memory_space<vmem>>, vector<1x1xf32>
    %34 = vector.broadcast %33 : vector<1x1xf32> to vector<8x1xf32>
    %35 = arith.addf %32, %34 : vector<8x1xf32>
    %cst_48 = arith.constant 0.000000e+00 : f32
    %36 = vector.broadcast %cst_48 : f32 to vector<8x1xf32>
    %37 = arith.subf %36, %35 : vector<8x1xf32>
    %38 = math.exp %37 : vector<8x1xf32>
    %cst_49 = arith.constant 1.000000e+00 : f32
    %39 = vector.broadcast %cst_49 : f32 to vector<8x1xf32>
    %40 = arith.addf %39, %38 : vector<8x1xf32>
    %cst_50 = arith.constant 1.000000e+00 : f32
    %41 = vector.broadcast %cst_50 : f32 to vector<8x1xf32>
    %42 = arith.divf %41, %40 : vector<8x1xf32>
    %c0_51 = arith.constant 0 : index
    %c0_52 = arith.constant 0 : index
    %c0_53 = arith.constant 0 : index
    %43 = vector.load %arg11[%c0_51, %c0_52, %c0_53] : memref<1x8x1xf32, #tpu.memory_space<vmem>>, vector<1x8x1xf32>
    %44 = vector.shape_cast %43 : vector<1x8x1xf32> to vector<8x1xf32>
    %45 = vector.shape_cast %42 : vector<8x1xf32> to vector<1x8x1xf32>
    tpu.vector_store %arg11[%c0_51, %c0_52, %c0_53], %45 {strides = array<i32>} : memref<1x8x1xf32, #tpu.memory_space<vmem>>, vector<1x8x1xf32>,
    return
  }
  func.func @transform_0(%arg0: i32) -> (i32, i32, i32) {
    %c0_i32 = arith.constant 0 : i32
    %c0_i32_0 = arith.constant 0 : i32
    %c0_i32_1 = arith.constant 0 : i32
    return %arg0, %c0_i32, %c0_i32_0 : i32, i32, i32
  }
  func.func @transform_1(%arg0: i32) -> (i32, i32) {
    %c0_i32 = arith.constant 0 : i32
    %c0_i32_0 = arith.constant 0 : i32
    %c0_i32_1 = arith.constant 0 : i32
    return %c0_i32, %c0_i32_0 : i32, i32
  }
  func.func @transform_2(%arg0: i32) -> (i32, i32) {
    %c0_i32 = arith.constant 0 : i32
    %c0_i32_0 = arith.constant 0 : i32
    %c0_i32_1 = arith.constant 0 : i32
    return %c0_i32, %c0_i32_0 : i32, i32
  }
  func.func @transform_3(%arg0: i32) -> (i32, i32) {
    %c0_i32 = arith.constant 0 : i32
    %c0_i32_0 = arith.constant 0 : i32
    %c0_i32_1 = arith.constant 0 : i32
    return %c0_i32, %c0_i32_0 : i32, i32
  }
  func.func @transform_4(%arg0: i32) -> (i32, i32) {
    %c0_i32 = arith.constant 0 : i32
    %c0_i32_0 = arith.constant 0 : i32
    %c0_i32_1 = arith.constant 0 : i32
    return %c0_i32, %c0_i32_0 : i32, i32
  }
  func.func @transform_5(%arg0: i32) -> (i32, i32) {
    %c0_i32 = arith.constant 0 : i32
    %c0_i32_0 = arith.constant 0 : i32
    %c0_i32_1 = arith.constant 0 : i32
    return %c0_i32, %c0_i32_0 : i32, i32
  }
  func.func @transform_6(%arg0: i32) -> (i32, i32) {
    %c0_i32 = arith.constant 0 : i32
    %c0_i32_0 = arith.constant 0 : i32
    %c0_i32_1 = arith.constant 0 : i32
    return %c0_i32, %c0_i32_0 : i32, i32
  }
  func.func @transform_7(%arg0: i32) -> (i32, i32) {
    %c0_i32 = arith.constant 0 : i32
    %c0_i32_0 = arith.constant 0 : i32
    %c0_i32_1 = arith.constant 0 : i32
    return %c0_i32, %c0_i32_0 : i32, i32
  }
  func.func @transform_8(%arg0: i32) -> (i32, i32) {
    %c0_i32 = arith.constant 0 : i32
    %c0_i32_0 = arith.constant 0 : i32
    %c0_i32_1 = arith.constant 0 : i32
    return %c0_i32, %c0_i32_0 : i32, i32
  }
  func.func @transform_9(%arg0: i32) -> (i32, i32) {
    %c0_i32 = arith.constant 0 : i32
    %c0_i32_0 = arith.constant 0 : i32
    %c0_i32_1 = arith.constant 0 : i32
    return %c0_i32, %c0_i32_0 : i32, i32
  }
  func.func @transform_10(%arg0: i32) -> (i32, i32, i32) {
    %c0_i32 = arith.constant 0 : i32
    %c0_i32_0 = arith.constant 0 : i32
    %c0_i32_1 = arith.constant 0 : i32
    return %arg0, %c0_i32, %c0_i32_0 : i32, i32, i32
  }
}

</mosaic_0001>

<llo_original>
// kernel: tpu_custom_call.1
$region0: #{tpu_custom_call.1}
  #allocation0 [shape = 'u32[]', space=smem, size = 0x4, offset = 0x4, fixed_abs, tag = 'smem constant byte address 0x4 - core index']
  #allocation1 [shape = 'u32[144,128]{1,0:T(1,128)}', space=vmem, size = 0x12000, scoped, tag = 'internal scratch']
  #allocation2 [shape = 'f32[8,128]{1,0:T(8,128)}', space=vmem, size = 0x1000, scoped, tag = 'scratch operand']
  #allocation3 [shape = 'f32[8,128]{1,0:T(8,128)}', space=vmem, size = 0x1000, scoped, tag = 'scratch operand']
  #allocation4 [shape = 'f32[8,32]{1,0:T(8,128)}', space=vmem, size = 0x1000, scoped, tag = 'scratch operand']
  #allocation5 [shape = 'f32[8,32]{1,0:T(8,128)}', space=vmem, size = 0x1000, scoped, tag = 'scratch operand']
  #allocation6 [shape = 'f32[1,32]{1,0:T(1,128)}', space=vmem, size = 0x200, scoped, tag = 'scratch operand']
  #allocation7 [shape = 'f32[1,32]{1,0:T(1,128)}', space=vmem, size = 0x200, scoped, tag = 'scratch operand']
  #allocation8 [shape = 'f32[1,1]{1,0:T(1,128)S(1)}', space=vmem, size = 0x200, scoped, tag = 'scoped memory for tpu_custom_call.1']
  %s0 = inlined_call_operand.hbm [shape: f32[2,8,128], index: 0, kind: input, shape index: {}]
  %s1 = inlined_call_operand.hbm [shape: f32[128,128], index: 1, kind: input, shape index: {}]
  %s2 = inlined_call_operand.vmem [shape: f32[32,128], index: 2, kind: input, shape index: {}]
  %s3 = inlined_call_operand.vmem [shape: f32[1,128], index: 3, kind: input, shape index: {}]
  %s4 = inlined_call_operand.hbm [shape: f32[128,128], index: 4, kind: input, shape index: {}]
  %s5 = inlined_call_operand.vmem [shape: f32[32,128], index: 5, kind: input, shape index: {}]
  %s6 = inlined_call_operand.vmem [shape: f32[1,128], index: 6, kind: input, shape index: {}]
  %s7 = inlined_call_operand.vmem [shape: f32[32,1], index: 7, kind: input, shape index: {}]
  %s8 = inlined_call_operand.vmem [shape: f32[32,1], index: 8, kind: input, shape index: {}]
  %s9 = inlined_call_operand.<no memory space> [shape: f32[1,1], index: 9, kind: input, shape index: {}]
  %s10 = inlined_call_operand.vmem [shape: f32[2,8,1], index: 10, kind: output, shape index: {}]
  %s11 = sld [smem:[#allocation0]]
  $region99: #{tpu_custom_call.1} parent=0
    _
  %s13 = ssub.s32 1, %s11
  %s14 = scalar_select 0, %s13, %s11
  %v15 = vstv %s9
  %16 = vst [vmem:[#allocation8] sm:$0x1] %v15
  $region1: #{tpu_custom_call.1} parent=0
    #allocation9 [shape = 'u8[8192]{0}', space=vmem, size = 0x2000, scoped, tag = 'input window, operand 0']
    #allocation10 [shape = 's32[2]{0}', space=sflag, size = 0x8, scoped, tag = 'scoped memory for tpu_custom_call.1']
    #allocation11 [shape = 'u8[65536]{0}', space=vmem, size = 0x10000, scoped, tag = 'input window, operand 1, single buffered']
    #allocation12 [shape = 's32[1]{0}', space=sflag, size = 0x4, scoped, tag = 'scoped memory for tpu_custom_call.1']
    #allocation13 [shape = 'u8[65536]{0}', space=vmem, size = 0x10000, scoped, tag = 'input window, operand 4, single buffered']
    %17 = vsyncpa [#allocation10], 0
    %s18 = scalar_lea.sflag [#allocation10], 1
    %19 = vsyncpa %s18, 0
    %20 = vsyncpa [#allocation12], 0
    loop: start=0, step=1, limit=4
    $region2: #{tpu_custom_call.1} parent=1 // loop_pre_header
      _
    $region3: #{tpu_custom_call.1} parent=1 // loop_header
      %s22 = sphi 0, %s26
      %p23 = scmp.ge.s32.totalorder %s22, 4
      %s32 = sphi 0, %s34
      %s35 = sphi 0, %s32
      %s36 = sphi 0, %s35
      %s52 = sphi 0, %s36
      %s56 = sphi 0, %s56
      %s58 = sphi 0, %s56
      %s59 = sphi 0, %s58
      %s73 = sphi 0, %s59
      %s77 = sphi 0, %s77
      %s79 = sphi 0, %s77
      %s80 = sphi 0, %s79
      %s94 = sphi 0, %s80
      %s98 = sphi 0, %s98
      %s100 = sphi 0, %s98
      %s101 = sphi 0, %s100
      %s115 = sphi 0, %s101
      %s119 = sphi 0, %s119
      %s121 = sphi 0, %s119
      %s122 = sphi 0, %s121
      %s136 = sphi 0, %s122
      %s140 = sphi 0, %s140
      %s142 = sphi 0, %s140
      %s143 = sphi 0, %s142
      %s157 = sphi 0, %s143
      %s161 = sphi 0, %s161
      %s163 = sphi 0, %s161
      %s164 = sphi 0, %s163
      %s178 = sphi 0, %s164
      %s182 = sphi 0, %s182
      %s184 = sphi 0, %s182
      %s185 = sphi 0, %s184
      %s199 = sphi 0, %s185
      %s203 = sphi 0, %s203
      %s205 = sphi 0, %s203
      %s206 = sphi 0, %s205
      %s220 = sphi 0, %s206
      %s224 = sphi 0, %s224
      %s226 = sphi 0, %s224
      %s227 = sphi 0, %s226
      %s241 = sphi 0, %s227
      %s247 = sphi 0, %s249
      %s250 = sphi 0, %s247
      %s251 = sphi 0, %s250
      %s267 = sphi 0, %s251
    $region4: #{tpu_custom_call.1} parent=1 // loop_header_branch
      %25 = sbr.rel (%p23) target = $region8
    $region5: #{tpu_custom_call.1} parent=1 // loop_body
      %s27 = ssub.s32 %s22, 1
      %s28 = ssub.s32 %s22, 2
      %s29 = sadd.s32 %s22, 1
      %s30 = ssub.s32 %s22, %s29
      %p31 = scmp.eq.s32.totalorder %s30, 0
      %s33 = sadd.s32 %s32, 1
      %s34 = scalar_select %p31, %s32, %s33
      %p37 = pneg %p31
      %p38 = scmp.eq.s32.totalorder %s22, 1
      %p39 = por %p37, %p38
      %p40 = scmp.ne.s32.totalorder %s32, %s35
      %p41 = scmp.eq.s32.totalorder %s22, 0
      %p42 = por %p40, %p41
      %p43 = scmp.ne.s32.totalorder %s32, %s35
      %p44 = scmp.eq.s32.totalorder %s27, 1
      %p45 = por %p43, %p44
      %p46 = scmp.ne.s32.totalorder %s35, %s36
      %p47 = scmp.eq.s32.totalorder %s27, 0
      %p48 = por %p46, %p47
      %p49 = scmp.ne.s32.totalorder %s35, %s36
      %p50 = scmp.eq.s32.totalorder %s28, 1
      %p51 = por %p49, %p50
      %p53 = scmp.ne.s32.totalorder %s36, %s52
      %p54 = scmp.eq.s32.totalorder %s28, 0
      %p55 = por %p53, %p54
      %s57 = sadd.s32 %s56, 1
      %p60 = scmp.eq.s32.totalorder %s22, 1
      %p61 = scmp.ne.s32.totalorder %s56, %s58
      %p62 = scmp.eq.s32.totalorder %s22, 0
      %p63 = por %p61, %p62
      %p64 = scmp.ne.s32.totalorder %s56, %s58
      %p65 = scmp.eq.s32.totalorder %s27, 1
      %p66 = por %p64, %p65
      %p67 = scmp.ne.s32.totalorder %s58, %s59
      %p68 = scmp.eq.s32.totalorder %s27, 0
      %p69 = por %p67, %p68
      %p70 = scmp.ne.s32.totalorder %s58, %s59
      %p71 = scmp.eq.s32.totalorder %s28, 1
      %p72 = por %p70, %p71
      %p74 = scmp.ne.s32.totalorder %s59, %s73
      %p75 = scmp.eq.s32.totalorder %s28, 0
      %p76 = por %p74, %p75
      %s78 = sadd.s32 %s77, 1
      %p81 = scmp.eq.s32.totalorder %s22, 1
      %p82 = scmp.ne.s32.totalorder %s77, %s79
      %p83 = scmp.eq.s32.totalorder %s22, 0
      %p84 = por %p82, %p83
      %p85 = scmp.ne.s32.totalorder %s77, %s79
      %p86 = scmp.eq.s32.totalorder %s27, 1
      %p87 = por %p85, %p86
      %p88 = scmp.ne.s32.totalorder %s79, %s80
      %p89 = scmp.eq.s32.totalorder %s27, 0
      %p90 = por %p88, %p89
      %p91 = scmp.ne.s32.totalorder %s79, %s80
      %p92 = scmp.eq.s32.totalorder %s28, 1
      %p93 = por %p91, %p92
      %p95 = scmp.ne.s32.totalorder %s80, %s94
      %p96 = scmp.eq.s32.totalorder %s28, 0
      %p97 = por %p95, %p96
      %s99 = sadd.s32 %s98, 1
      %p102 = scmp.eq.s32.totalorder %s22, 1
      %p103 = scmp.ne.s32.totalorder %s98, %s100
      %p104 = scmp.eq.s32.totalorder %s22, 0
      %p105 = por %p103, %p104
      %p106 = scmp.ne.s32.totalorder %s98, %s100
      %p107 = scmp.eq.s32.totalorder %s27, 1
      %p108 = por %p106, %p107
      %p109 = scmp.ne.s32.totalorder %s100, %s101
      %p110 = scmp.eq.s32.totalorder %s27, 0
      %p111 = por %p109, %p110
      %p112 = scmp.ne.s32.totalorder %s100, %s101
      %p113 = scmp.eq.s32.totalorder %s28, 1
      %p114 = por %p112, %p113
      %p116 = scmp.ne.s32.totalorder %s101, %s115
      %p117 = scmp.eq.s32.totalorder %s28, 0
      %p118 = por %p116, %p117
      %s120 = sadd.s32 %s119, 1
      %p123 = scmp.eq.s32.totalorder %s22, 1
      %p124 = scmp.ne.s32.totalorder %s119, %s121
      %p125 = scmp.eq.s32.totalorder %s22, 0
      %p126 = por %p124, %p125
      %p127 = scmp.ne.s32.totalorder %s119, %s121
      %p128 = scmp.eq.s32.totalorder %s27, 1
      %p129 = por %p127, %p128
      %p130 = scmp.ne.s32.totalorder %s121, %s122
      %p131 = scmp.eq.s32.totalorder %s27, 0
      %p132 = por %p130, %p131
      %p133 = scmp.ne.s32.totalorder %s121, %s122
      %p134 = scmp.eq.s32.totalorder %s28, 1
      %p135 = por %p133, %p134
      %p137 = scmp.ne.s32.totalorder %s122, %s136
      %p138 = scmp.eq.s32.totalorder %s28, 0
      %p139 = por %p137, %p138
      %s141 = sadd.s32 %s140, 1
      %p144 = scmp.eq.s32.totalorder %s22, 1
      %p145 = scmp.ne.s32.totalorder %s140, %s142
      %p146 = scmp.eq.s32.totalorder %s22, 0
      %p147 = por %p145, %p146
      %p148 = scmp.ne.s32.totalorder %s140, %s142
      %p149 = scmp.eq.s32.totalorder %s27, 1
      %p150 = por %p148, %p149
      %p151 = scmp.ne.s32.totalorder %s142, %s143
      %p152 = scmp.eq.s32.totalorder %s27, 0
      %p153 = por %p151, %p152
      %p154 = scmp.ne.s32.totalorder %s142, %s143
      %p155 = scmp.eq.s32.totalorder %s28, 1
      %p156 = por %p154, %p155
      %p158 = scmp.ne.s32.totalorder %s143, %s157
      %p159 = scmp.eq.s32.totalorder %s28, 0
      %p160 = por %p158, %p159
      %s162 = sadd.s32 %s161, 1
      %p165 = scmp.eq.s32.totalorder %s22, 1
      %p166 = scmp.ne.s32.totalorder %s161, %s163
      %p167 = scmp.eq.s32.totalorder %s22, 0
      %p168 = por %p166, %p167
      %p169 = scmp.ne.s32.totalorder %s161, %s163
      %p170 = scmp.eq.s32.totalorder %s27, 1
      %p171 = por %p169, %p170
      %p172 = scmp.ne.s32.totalorder %s163, %s164
      %p173 = scmp.eq.s32.totalorder %s27, 0
      %p174 = por %p172, %p173
      %p175 = scmp.ne.s32.totalorder %s163, %s164
      %p176 = scmp.eq.s32.totalorder %s28, 1
      %p177 = por %p175, %p176
      %p179 = scmp.ne.s32.totalorder %s164, %s178
      %p180 = scmp.eq.s32.totalorder %s28, 0
      %p181 = por %p179, %p180
      %s183 = sadd.s32 %s182, 1
      %p186 = scmp.eq.s32.totalorder %s22, 1
      %p187 = scmp.ne.s32.totalorder %s182, %s184
      %p188 = scmp.eq.s32.totalorder %s22, 0
      %p189 = por %p187, %p188
      %p190 = scmp.ne.s32.totalorder %s182, %s184
      %p191 = scmp.eq.s32.totalorder %s27, 1
      %p192 = por %p190, %p191
      %p193 = scmp.ne.s32.totalorder %s184, %s185
      %p194 = scmp.eq.s32.totalorder %s27, 0
      %p195 = por %p193, %p194
      %p196 = scmp.ne.s32.totalorder %s184, %s185
      %p197 = scmp.eq.s32.totalorder %s28, 1
      %p198 = por %p196, %p197
      %p200 = scmp.ne.s32.totalorder %s185, %s199
      %p201 = scmp.eq.s32.totalorder %s28, 0
      %p202 = por %p200, %p201
      %s204 = sadd.s32 %s203, 1
      %p207 = scmp.eq.s32.totalorder %s22, 1
      %p208 = scmp.ne.s32.totalorder %s203, %s205
      %p209 = scmp.eq.s32.totalorder %s22, 0
      %p210 = por %p208, %p209
      %p211 = scmp.ne.s32.totalorder %s203, %s205
      %p212 = scmp.eq.s32.totalorder %s27, 1
      %p213 = por %p211, %p212
      %p214 = scmp.ne.s32.totalorder %s205, %s206
      %p215 = scmp.eq.s32.totalorder %s27, 0
      %p216 = por %p214, %p215
      %p217 = scmp.ne.s32.totalorder %s205, %s206
      %p218 = scmp.eq.s32.totalorder %s28, 1
      %p219 = por %p217, %p218
      %p221 = scmp.ne.s32.totalorder %s206, %s220
      %p222 = scmp.eq.s32.totalorder %s28, 0
      %p223 = por %p221, %p222
      %s225 = sadd.s32 %s224, 1
      %p228 = scmp.eq.s32.totalorder %s22, 1
      %p229 = scmp.ne.s32.totalorder %s224, %s226
      %p230 = scmp.eq.s32.totalorder %s22, 0
      %p231 = por %p229, %p230
      %p232 = scmp.ne.s32.totalorder %s224, %s226
      %p233 = scmp.eq.s32.totalorder %s27, 1
      %p234 = por %p232, %p233
      %p235 = scmp.ne.s32.totalorder %s226, %s227
      %p236 = scmp.eq.s32.totalorder %s27, 0
      %p237 = por %p235, %p236
      %p238 = scmp.ne.s32.totalorder %s226, %s227
      %p239 = scmp.eq.s32.totalorder %s28, 1
      %p240 = por %p238, %p239
      %p242 = scmp.ne.s32.totalorder %s227, %s241
      %p243 = scmp.eq.s32.totalorder %s28, 0
      %p244 = por %p242, %p243
      %s245 = ssub.s32 %s22, %s29
      %p246 = scmp.eq.s32.totalorder %s245, 0
      %s248 = sadd.s32 %s247, 1
      %s249 = scalar_select %p246, %s247, %s248
      %p252 = pneg %p246
      %p253 = scmp.eq.s32.totalorder %s22, 1
      %p254 = por %p252, %p253
      %p255 = scmp.ne.s32.totalorder %s247, %s250
      %p256 = scmp.eq.s32.totalorder %s22, 0
      %p257 = por %p255, %p256
      %p258 = scmp.ne.s32.totalorder %s247, %s250
      %p259 = scmp.eq.s32.totalorder %s27, 1
      %p260 = por %p258, %p259
      %p261 = scmp.ne.s32.totalorder %s250, %s251
      %p262 = scmp.eq.s32.totalorder %s27, 0
      %p263 = por %p261, %p262
      %p264 = scmp.ne.s32.totalorder %s250, %s251
      %p265 = scmp.eq.s32.totalorder %s28, 1
      %p266 = por %p264, %p265
      %p268 = scmp.ne.s32.totalorder %s251, %s267
      %p269 = scmp.eq.s32.totalorder %s28, 0
      %p270 = por %p268, %p269
      %p271 = scmp.le.s32.totalorder 1, %s22
      %p272 = scmp.lt.s32.totalorder %s22, 3
      %p273 = pnand %p271, %p272
      %p274 = pneg %p273
      // Predicated region
      $region9: #{tpu_custom_call.1} parent=5 // pred_check
        _
      $region10: #{tpu_custom_call.1} parent=5 // pred_check_branch
        %276 = sbr.rel (%p273) target = $region12
      $region11: #{tpu_custom_call.1} parent=5 // pred_region
        %s277 = ssub.s32 %s22, 1
        // Predicated region
        $region13: #{tpu_custom_call.1} parent=11 // pred_check
          %p278 = pneg %p69
        $region14: #{tpu_custom_call.1} parent=11 // pred_check_branch
          %280 = sbr.rel (%p278) target = $region16
        $region15: #{tpu_custom_call.1} parent=11 // pred_region
          %s282 = ssub.s32 2048, 2048
          %283 = vsyncadd [#allocation12], %s282
          %s284 = sshll.u32 [#allocation11], 4
          %s285 = int_to_ptr.vmem [resolvable:$true] %s284
          %290 = dma.hbm_to_vmem [thread:$0]  %s1, 2048, %s285, [#allocation12], 128, 128, 8
        $region16: #{tpu_custom_call.1} parent=11 // pred_fallthru
          _
        // Predicated region
        $region17: #{tpu_custom_call.1} parent=11 // pred_check
          %p291 = pneg %p90
        $region18: #{tpu_custom_call.1} parent=11 // pred_check_branch
          %293 = sbr.rel (%p291) target = $region20
        $region19: #{tpu_custom_call.1} parent=11 // pred_region
          _
        $region20: #{tpu_custom_call.1} parent=11 // pred_fallthru
          _
        // Predicated region
        $region21: #{tpu_custom_call.1} parent=11 // pred_check
          %p294 = pneg %p111
        $region22: #{tpu_custom_call.1} parent=11 // pred_check_branch
          %296 = sbr.rel (%p294) target = $region24
        $region23: #{tpu_custom_call.1} parent=11 // pred_region
          _
        $region24: #{tpu_custom_call.1} parent=11 // pred_fallthru
          _
        // Predicated region
        $region25: #{tpu_custom_call.1} parent=11 // pred_check
          %p297 = pneg %p132
        $region26: #{tpu_custom_call.1} parent=11 // pred_check_branch
          %299 = sbr.rel (%p297) target = $region28
        $region27: #{tpu_custom_call.1} parent=11 // pred_region
          %s301 = ssub.s32 2048, 2048
          %302 = vsyncadd [#allocation12], %s301
          %s303 = sshll.u32 [#allocation13], 4
          %s304 = int_to_ptr.vmem [resolvable:$true] %s303
          %309 = dma.hbm_to_vmem [thread:$0]  %s4, 2048, %s304, [#allocation12], 128, 128, 8
        $region28: #{tpu_custom_call.1} parent=11 // pred_fallthru
          _
        // Predicated region
        $region29: #{tpu_custom_call.1} parent=11 // pred_check
          %p310 = pneg %p153
        $region30: #{tpu_custom_call.1} parent=11 // pred_check_branch
          %312 = sbr.rel (%p310) target = $region32
        $region31: #{tpu_custom_call.1} parent=11 // pred_region
          _
        $region32: #{tpu_custom_call.1} parent=11 // pred_fallthru
          _
        // Predicated region
        $region33: #{tpu_custom_call.1} parent=11 // pred_check
          %p313 = pneg %p174
        $region34: #{tpu_custom_call.1} parent=11 // pred_check_branch
          %315 = sbr.rel (%p313) target = $region36
        $region35: #{tpu_custom_call.1} parent=11 // pred_region
          _
        $region36: #{tpu_custom_call.1} parent=11 // pred_fallthru
          _
        // Predicated region
        $region37: #{tpu_custom_call.1} parent=11 // pred_check
          %p316 = pneg %p195
        $region38: #{tpu_custom_call.1} parent=11 // pred_check_branch
          %318 = sbr.rel (%p316) target = $region40
        $region39: #{tpu_custom_call.1} parent=11 // pred_region
          _
        $region40: #{tpu_custom_call.1} parent=11 // pred_fallthru
          _
        // Predicated region
        $region41: #{tpu_custom_call.1} parent=11 // pred_check
          %p319 = pneg %p216
        $region42: #{tpu_custom_call.1} parent=11 // pred_check_branch
          %321 = sbr.rel (%p319) target = $region44
        $region43: #{tpu_custom_call.1} parent=11 // pred_region
          _
        $region44: #{tpu_custom_call.1} parent=11 // pred_fallthru
          _
        // Predicated region
        $region45: #{tpu_custom_call.1} parent=11 // pred_check
          %p322 = pneg %p237
        $region46: #{tpu_custom_call.1} parent=11 // pred_check_branch
          %324 = sbr.rel (%p322) target = $region48
        $region47: #{tpu_custom_call.1} parent=11 // pred_region
          _
        $region48: #{tpu_custom_call.1} parent=11 // pred_fallthru
          _
      $region12: #{tpu_custom_call.1} parent=5 // pred_fallthru
        _
      %p325 = scmp.lt.s32.totalorder %s22, 2
      // Predicated region
      $region49: #{tpu_custom_call.1} parent=5 // pred_check
        %p326 = pneg %p325
      $region50: #{tpu_custom_call.1} parent=5 // pred_check_branch
        %328 = sbr.rel (%p326) target = $region52
      $region51: #{tpu_custom_call.1} parent=5 // pred_region
        // Predicated region
        $region53: #{tpu_custom_call.1} parent=51 // pred_check
          %p329 = pneg %p42
        $region54: #{tpu_custom_call.1} parent=51 // pred_check_branch
          %331 = sbr.rel (%p329) target = $region56
        $region55: #{tpu_custom_call.1} parent=51 // pred_region
          %s332 = sand.u32 %s32, 1
          %s333 = scalar_lea.sflag [#allocation10], %s332
          %s334 = sand.u32 %s32, 1
          %s335 = smul.addr %s334, 8
          %s336 = scalar_lea.vmem [#allocation9], %s335
          %s338 = ssub.s32 128, 128
          %339 = vsyncadd %s333, %s338
          %s340 = smul.addr %s22, 128
          %s341 = scalar_lea.hbm %s0, %s340
          %s343 = sshll.u32 %s336, 4
          %s344 = int_to_ptr.vmem [resolvable:$true] %s343
          %346 = dma.hbm_to_vmem [thread:$0]  %s341, 128, %s344, %s333
        $region56: #{tpu_custom_call.1} parent=51 // pred_fallthru
          _
      $region52: #{tpu_custom_call.1} parent=5 // pred_fallthru
        _
      %p347 = scmp.le.s32.totalorder 1, %s22
      %p348 = scmp.lt.s32.totalorder %s22, 3
      %p349 = pnand %p347, %p348
      %p350 = pneg %p349
      // Predicated region
      $region57: #{tpu_custom_call.1} parent=5 // pred_check
        _
      $region58: #{tpu_custom_call.1} parent=5 // pred_check_branch
        %352 = sbr.rel (%p349) target = $region60
      $region59: #{tpu_custom_call.1} parent=5 // pred_region
        %s353 = ssub.s32 %s22, 1
        %s354 = sand.u32 %s35, 1
        %s355 = scalar_lea.sflag [#allocation10], %s354
        %s356 = sand.u32 %s35, 1
        %s357 = smul.addr %s356, 8
        %s358 = scalar_lea.vmem [#allocation9], %s357
        // Predicated region
        $region61: #{tpu_custom_call.1} parent=59 // pred_check
          %p359 = pneg %p48
        $region62: #{tpu_custom_call.1} parent=59 // pred_check_branch
          %361 = sbr.rel (%p359) target = $region64
        $region63: #{tpu_custom_call.1} parent=59 // pred_region
          %362 = dma.done %s355, 128
        $region64: #{tpu_custom_call.1} parent=59 // pred_fallthru
          _
        // Predicated region
        $region65: #{tpu_custom_call.1} parent=59 // pred_check
          %p363 = pneg %p69
        $region66: #{tpu_custom_call.1} parent=59 // pred_check_branch
          %365 = sbr.rel (%p363) target = $region68
        $region67: #{tpu_custom_call.1} parent=59 // pred_region
          %366 = dma.done [#allocation12], 2048
        $region68: #{tpu_custom_call.1} parent=59 // pred_fallthru
          _
        // Predicated region
        $region69: #{tpu_custom_call.1} parent=59 // pred_check
          %p367 = pneg %p132
        $region70: #{tpu_custom_call.1} parent=59 // pred_check_branch
          %369 = sbr.rel (%p367) target = $region72
        $region71: #{tpu_custom_call.1} parent=59 // pred_region
          %370 = dma.done [#allocation12], 2048
        $region72: #{tpu_custom_call.1} parent=59 // pred_fallthru
          _
        %s371 = sand.u32 %s35, 1
        %s372 = scalar_lea.sflag [#allocation10], %s371
        %s373 = sand.u32 %s35, 1
        %s374 = smul.addr %s373, 8
        %s375 = scalar_lea.vmem [#allocation9], %s374
        %p376 = pneg %p48
        %p377 = pneg %p45
        %p378 = pneg %p69
        %p379 = pneg %p66
        %p380 = pneg %p90
        %p381 = pneg %p87
        %p382 = pneg %p111
        %p383 = pneg %p108
        %p384 = pneg %p132
        %p385 = pneg %p129
        %p386 = pneg %p153
        %p387 = pneg %p150
        %p388 = pneg %p174
        %p389 = pneg %p171
        %p390 = pneg %p195
        %p391 = pneg %p192
        %p392 = pneg %p216
        %p393 = pneg %p213
        %p394 = pneg %p237
        %p395 = pneg %p234
        %p396 = pneg %p263
        %p397 = pneg %p260
        %p398 = scmp.lt.s32.totalorder %s27, 1
        %s399 = scalar_select %p398, %s27, 1
        %s400 = smul.addr %s399, 8
        %s401 = scalar_lea.vmem %s10, %s400
        %p402 = scmp.lt.s32.totalorder %s27, 1
        %s403 = scalar_select %p402, %s27, 1
        %s404 = smul.addr %s403, 8
        %s405 = scalar_lea.vmem %s10, %s404
        %v406 = vld [vmem:[%s358] sm:$0xff]
        %v407 = vld [vmem:[#allocation11] sm:$0xff]
        %v408 = vld [vmem:[#allocation11 + $0x8] sm:$0xff]
        %v409 = vld [vmem:[#allocation11 + $0x10] sm:$0xff]
        %v410 = vld [vmem:[#allocation11 + $0x18] sm:$0xff]
        %v411 = vld [vmem:[#allocation11 + $0x20] sm:$0xff]
        %v412 = vld [vmem:[#allocation11 + $0x28] sm:$0xff]
        %v413 = vld [vmem:[#allocation11 + $0x30] sm:$0xff]
        %v414 = vld [vmem:[#allocation11 + $0x38] sm:$0xff]
        %v415 = vld [vmem:[#allocation11 + $0x40] sm:$0xff]
        %v416 = vld [vmem:[#allocation11 + $0x48] sm:$0xff]
        %v417 = vld [vmem:[#allocation11 + $0x50] sm:$0xff]
        %v418 = vld [vmem:[#allocation11 + $0x58] sm:$0xff]
        %v419 = vld [vmem:[#allocation11 + $0x60] sm:$0xff]
        %v420 = vld [vmem:[#allocation11 + $0x68] sm:$0xff]
        %v421 = vld [vmem:[#allocation11 + $0x70] sm:$0xff]
        %v422 = vld [vmem:[#allocation11 + $0x78] sm:$0xff]
        %v423 = vld [vmem:[%s3] sm:$0x1]
        %v425 = vlaneseq
        %v426 = vshrl.u32 %v425, 7
        %v427 = vsub.s32 0, %v426
        %v428 = vrot.slane %v423, %v427
        %430 = vmatprep.subr.mxu0 0.0
        %431 = vmatpush1.msra.mxu0 %v407
        %432 = vmatprep.subr.mxu0 0.0
        %433 = vmatpush1.msra.mxu0 %v408
        %434 = vmatprep.subr.mxu0 0.0
        %435 = vmatpush1.msra.mxu0 %v409
        %436 = vmatprep.subr.mxu0 0.0
        %437 = vmatpush1.msra.mxu0 %v410
        %438 = vmatprep.subr.mxu0 0.0
        %439 = vmatpush1.msra.mxu0 %v411
        %440 = vmatprep.subr.mxu0 0.0
        %441 = vmatpush1.msra.mxu0 %v412
        %442 = vmatprep.subr.mxu0 0.0
        %443 = vmatpush1.msra.mxu0 %v413
        %444 = vmatprep.subr.mxu0 0.0
        %445 = vmatpush1.msra.mxu0 %v414
        %446 = vmatprep.subr.mxu0 0.0
        %447 = vmatpush1.msra.mxu0 %v415
        %448 = vmatprep.subr.mxu0 0.0
        %449 = vmatpush1.msra.mxu0 %v416
        %450 = vmatprep.subr.mxu0 0.0
        %451 = vmatpush1.msra.mxu0 %v417
        %452 = vmatprep.subr.mxu0 0.0
        %453 = vmatpush1.msra.mxu0 %v418
        %454 = vmatprep.subr.mxu0 0.0
        %455 = vmatpush1.msra.mxu0 %v419
        %456 = vmatprep.subr.mxu0 0.0
        %457 = vmatpush1.msra.mxu0 %v420
        %458 = vmatprep.subr.mxu0 0.0
        %459 = vmatpush1.msra.mxu0 %v421
        %460 = vmatprep.subr.mxu0 0.0
        %461 = vmatpush1.msra.mxu0 %v422
        %462 = vmatprep.subr.mxu0 0.0
        %463 = vmatpush1.msra.mxu0 0.0
        %464 = vmatprep.subr.mxu0 0.0
        %465 = vmatpush1.msra.mxu0 0.0
        %466 = vmatprep.subr.mxu0 0.0
        %467 = vmatpush1.msra.mxu0 0.0
        %468 = vmatprep.subr.mxu0 0.0
        %469 = vmatpush1.msra.mxu0 0.0
        %470 = vmatprep.subr.mxu0 0.0
        %471 = vmatpush1.msra.mxu0 0.0
        %472 = vmatprep.subr.mxu0 0.0
        %473 = vmatpush1.msra.mxu0 0.0
        %474 = vmatprep.subr.mxu0 0.0
        %475 = vmatpush1.msra.mxu0 0.0
        %476 = vmatprep.subr.mxu0 0.0
        %477 = vmatpush1.msra.mxu0 0.0
        %478 = vmatprep.subr.mxu0 0.0
        %479 = vmatpush1.msra.mxu0 0.0
        %480 = vmatprep.subr.mxu0 0.0
        %481 = vmatpush1.msra.mxu0 0.0
        %482 = vmatprep.subr.mxu0 0.0
        %483 = vmatpush1.msra.mxu0 0.0
        %484 = vmatprep.subr.mxu0 0.0
        %485 = vmatpush1.msra.mxu0 0.0
        %486 = vmatprep.subr.mxu0 0.0
        %487 = vmatpush1.msra.mxu0 0.0
        %488 = vmatprep.subr.mxu0 0.0
        %489 = vmatpush1.msra.mxu0 0.0
        %490 = vmatprep.subr.mxu0 0.0
        %491 = vmatpush1.msra.mxu0 0.0
        %492 = vmatprep.subr.mxu0 0.0
        %493 = vmatpush1.msra.mxu0 0.0
        %494 = vmatprep.mubr.f32.mxu0 0.0
        %495 = vmatmul.mubr.f32.gmra.mrb[0].mxu0 %v406
        %v496 = vpop.f32.mrb[0].mxu0
        %v497 = vadd.f32 %v428, %v496
        %v498 = vpop.f32.mrb[0].mxu0
        %499 = vdwg.mxu0
        %500 = vst [vmem:[#allocation2] sm:$0xff] %v497
        %v501 = vld [vmem:[#allocation13] sm:$0xff]
        %v502 = vld [vmem:[#allocation13 + $0x8] sm:$0xff]
        %v503 = vld [vmem:[#allocation13 + $0x10] sm:$0xff]
        %v504 = vld [vmem:[#allocation13 + $0x18] sm:$0xff]
        %v505 = vld [vmem:[#allocation13 + $0x20] sm:$0xff]
        %v506 = vld [vmem:[#allocation13 + $0x28] sm:$0xff]
        %v507 = vld [vmem:[#allocation13 + $0x30] sm:$0xff]
        %v508 = vld [vmem:[#allocation13 + $0x38] sm:$0xff]
        %v509 = vld [vmem:[#allocation13 + $0x40] sm:$0xff]
        %v510 = vld [vmem:[#allocation13 + $0x48] sm:$0xff]
        %v511 = vld [vmem:[#allocation13 + $0x50] sm:$0xff]
        %v512 = vld [vmem:[#allocation13 + $0x58] sm:$0xff]
        %v513 = vld [vmem:[#allocation13 + $0x60] sm:$0xff]
        %v514 = vld [vmem:[#allocation13 + $0x68] sm:$0xff]
        %v515 = vld [vmem:[#allocation13 + $0x70] sm:$0xff]
        %v516 = vld [vmem:[#allocation13 + $0x78] sm:$0xff]
        %v517 = vld [vmem:[%s6] sm:$0x1]
        %v519 = vlaneseq
        %v520 = vshrl.u32 %v519, 7
        %v521 = vsub.s32 0, %v520
        %v522 = vrot.slane %v517, %v521
        %524 = vmatprep.subr.mxu0 0.0
        %525 = vmatpush1.msra.mxu0 %v501
        %526 = vmatprep.subr.mxu0 0.0
        %527 = vmatpush1.msra.mxu0 %v502
        %528 = vmatprep.subr.mxu0 0.0
        %529 = vmatpush1.msra.mxu0 %v503
        %530 = vmatprep.subr.mxu0 0.0
        %531 = vmatpush1.msra.mxu0 %v504
        %532 = vmatprep.subr.mxu0 0.0
        %533 = vmatpush1.msra.mxu0 %v505
        %534 = vmatprep.subr.mxu0 0.0
        %535 = vmatpush1.msra.mxu0 %v506
        %536 = vmatprep.subr.mxu0 0.0
        %537 = vmatpush1.msra.mxu0 %v507
        %538 = vmatprep.subr.mxu0 0.0
        %539 = vmatpush1.msra.mxu0 %v508
        %540 = vmatprep.subr.mxu0 0.0
        %541 = vmatpush1.msra.mxu0 %v509
        %542 = vmatprep.subr.mxu0 0.0
        %543 = vmatpush1.msra.mxu0 %v510
        %544 = vmatprep.subr.mxu0 0.0
        %545 = vmatpush1.msra.mxu0 %v511
        %546 = vmatprep.subr.mxu0 0.0
        %547 = vmatpush1.msra.mxu0 %v512
        %548 = vmatprep.subr.mxu0 0.0
        %549 = vmatpush1.msra.mxu0 %v513
        %550 = vmatprep.subr.mxu0 0.0
        %551 = vmatpush1.msra.mxu0 %v514
        %552 = vmatprep.subr.mxu0 0.0
        %553 = vmatpush1.msra.mxu0 %v515
        %554 = vmatprep.subr.mxu0 0.0
        %555 = vmatpush1.msra.mxu0 %v516
        %556 = vmatprep.subr.mxu0 0.0
        %557 = vmatpush1.msra.mxu0 0.0
        %558 = vmatprep.subr.mxu0 0.0
        %559 = vmatpush1.msra.mxu0 0.0
        %560 = vmatprep.subr.mxu0 0.0
        %561 = vmatpush1.msra.mxu0 0.0
        %562 = vmatprep.subr.mxu0 0.0
        %563 = vmatpush1.msra.mxu0 0.0
        %564 = vmatprep.subr.mxu0 0.0
        %565 = vmatpush1.msra.mxu0 0.0
        %566 = vmatprep.subr.mxu0 0.0
        %567 = vmatpush1.msra.mxu0 0.0
        %568 = vmatprep.subr.mxu0 0.0
        %569 = vmatpush1.msra.mxu0 0.0
        %570 = vmatprep.subr.mxu0 0.0
        %571 = vmatpush1.msra.mxu0 0.0
        %572 = vmatprep.subr.mxu0 0.0
        %573 = vmatpush1.msra.mxu0 0.0
        %574 = vmatprep.subr.mxu0 0.0
        %575 = vmatpush1.msra.mxu0 0.0
        %576 = vmatprep.subr.mxu0 0.0
        %577 = vmatpush1.msra.mxu0 0.0
        %578 = vmatprep.subr.mxu0 0.0
        %579 = vmatpush1.msra.mxu0 0.0
        %580 = vmatprep.subr.mxu0 0.0
        %581 = vmatpush1.msra.mxu0 0.0
        %582 = vmatprep.subr.mxu0 0.0
        %583 = vmatpush1.msra.mxu0 0.0
        %584 = vmatprep.subr.mxu0 0.0
        %585 = vmatpush1.msra.mxu0 0.0
        %586 = vmatprep.subr.mxu0 0.0
        %587 = vmatpush1.msra.mxu0 0.0
        %588 = vmatprep.mubr.f32.mxu0 0.0
        %589 = vmatmul.mubr.f32.gmra.mrb[0].mxu0 %v406
        %v590 = vpop.f32.mrb[0].mxu0
        %v591 = vadd.f32 %v522, %v590
        %v592 = vpop.f32.mrb[0].mxu0
        %593 = vdwg.mxu0
        %594 = vst [vmem:[#allocation3] sm:$0xff] %v591
        %v595 = vld [vmem:[%s2] sm:$0xff]
        %v596 = vld [vmem:[%s2 + $0x8] sm:$0xff]
        %v597 = vld [vmem:[%s2 + $0x10] sm:$0xff]
        %v598 = vld [vmem:[%s2 + $0x18] sm:$0xff]
        %vm599 = vcmask 253952
        %600 = vst.msk [vmem:[#allocation6] sm:$0x1] %vm599, 0.0
        %601 = vst.msk [vmem:[#allocation7] sm:$0x1] %vm599, 0.0
        loop: start=0, step=1, limit=8
        $region73: #{tpu_custom_call.1} parent=59 // loop_pre_header
          _
        $region74: #{tpu_custom_call.1} parent=59 // loop_header
          %s603 = sphi 0, %s607
          %p604 = scmp.ge.s32.totalorder %s603, 8
        $region75: #{tpu_custom_call.1} parent=59 // loop_header_branch
          %606 = sbr.rel (%p604) target = $region79
        $region76: #{tpu_custom_call.1} parent=59 // loop_body
          %v608 = vld [vmem:[#allocation6] sm:$0x1]
          %v609 = vld [vmem:[#allocation7] sm:$0x1]
          %s610 = scalar_lea.vmem [#allocation2], %s603
          %v611 = vld [vmem:[%s610] sm:$0x1]
          %vm612 = vcmask 261120
          %v614 = vsel %vm612, %v608, 0
          %616 = vmatprep.subr.mxu0 0.0
          %617 = vmatpush1.msra.mxu0 %v595
          %618 = vmatprep.subr.mxu0 0.0
          %619 = vmatpush1.msra.mxu0 %v596
          %620 = vmatprep.subr.mxu0 0.0
          %621 = vmatpush1.msra.mxu0 %v597
          %622 = vmatprep.subr.mxu0 0.0
          %623 = vmatpush1.msra.mxu0 %v598
          %624 = vmatprep.subr.mxu0 0.0
          %625 = vmatpush1.msra.mxu0 0.0
          %626 = vmatprep.subr.mxu0 0.0
          %627 = vmatpush1.msra.mxu0 0.0
          %628 = vmatprep.subr.mxu0 0.0
          %629 = vmatpush1.msra.mxu0 0.0
          %630 = vmatprep.subr.mxu0 0.0
          %631 = vmatpush1.msra.mxu0 0.0
          %632 = vmatprep.subr.mxu0 0.0
          %633 = vmatpush1.msra.mxu0 0.0
          %634 = vmatprep.subr.mxu0 0.0
          %635 = vmatpush1.msra.mxu0 0.0
          %636 = vmatprep.subr.mxu0 0.0
          %637 = vmatpush1.msra.mxu0 0.0
          %638 = vmatprep.subr.mxu0 0.0
          %639 = vmatpush1.msra.mxu0 0.0
          %640 = vmatprep.subr.mxu0 0.0
          %641 = vmatpush1.msra.mxu0 0.0
          %642 = vmatprep.subr.mxu0 0.0
          %643 = vmatpush1.msra.mxu0 0.0
          %644 = vmatprep.subr.mxu0 0.0
          %645 = vmatpush1.msra.mxu0 0.0
          %646 = vmatprep.subr.mxu0 0.0
          %647 = vmatpush1.msra.mxu0 0.0
          %648 = vmatprep.subr.mxu0 0.0
          %649 = vmatpush1.msra.mxu0 0.0
          %650 = vmatprep.subr.mxu0 0.0
          %651 = vmatpush1.msra.mxu0 0.0
          %652 = vmatprep.subr.mxu0 0.0
          %653 = vmatpush1.msra.mxu0 0.0
          %654 = vmatprep.subr.mxu0 0.0
          %655 = vmatpush1.msra.mxu0 0.0
          %656 = vmatprep.subr.mxu0 0.0
          %657 = vmatpush1.msra.mxu0 0.0
          %658 = vmatprep.subr.mxu0 0.0
          %659 = vmatpush1.msra.mxu0 0.0
          %660 = vmatprep.subr.mxu0 0.0
          %661 = vmatpush1.msra.mxu0 0.0
          %662 = vmatprep.subr.mxu0 0.0
          %663 = vmatpush1.msra.mxu0 0.0
          %664 = vmatprep.subr.mxu0 0.0
          %665 = vmatpush1.msra.mxu0 0.0
          %666 = vmatprep.subr.mxu0 0.0
          %667 = vmatpush1.msra.mxu0 0.0
          %668 = vmatprep.subr.mxu0 0.0
          %669 = vmatpush1.msra.mxu0 0.0
          %670 = vmatprep.subr.mxu0 0.0
          %671 = vmatpush1.msra.mxu0 0.0
          %672 = vmatprep.subr.mxu0 0.0
          %673 = vmatpush1.msra.mxu0 0.0
          %674 = vmatprep.subr.mxu0 0.0
          %675 = vmatpush1.msra.mxu0 0.0
          %676 = vmatprep.subr.mxu0 0.0
          %677 = vmatpush1.msra.mxu0 0.0
          %678 = vmatprep.subr.mxu0 0.0
          %679 = vmatpush1.msra.mxu0 0.0
          %680 = vmatprep.mubr.f32.mxu0 0.0
          %681 = vmatmul.mubr.f32.gmra.mrb[0].mxu0 %v614
          %v682 = vpop.f32.mrb[0].mxu0
          %v683 = vadd.f32 0.0, %v682
          %v684 = vpop.f32.mrb[0].mxu0
          %685 = vdwg.mxu0
          %v686 = vadd.f32 %v611, %v683
          %v687 = vsub.f32 0.0, %v686
          %v688 = vmul.f32 %v687, 1.442695
          %v689 = vpow.pop %v688
          %v690 = vadd.f32 %v689, 1.0
          %v691 = vrcp.pop %v690
          %v692 = vmul.f32 1.0, %v691
          %v693 = vtanh.pop %v686
          %v695 = vlaneseq
          %v696 = vshrl.u32 %v695, 7
          %v697 = vsub.s32 0, %v696
          %v698 = vrot.slane %v609, %v697
          %699 = vrot.lane.b32.xlu0 %v698, 32
          %v700 = vpop.permute.xlu0 %699
          %v702 = vmul.f32 %v692, %v700
          %704 = vrot.lane.b32.xlu0 %v693, 64
          %v705 = vpop.permute.xlu0 %704
          %v707 = vmul.f32 %v692, %v705
          %709 = vrot.lane.b32.xlu0 %v707, 32
          %v710 = vpop.permute.xlu0 %709
          %v712 = vadd.f32 %v702, %v710
          %v713 = vtanh.pop %v712
          %715 = vrot.lane.b32.xlu0 %v713, 64
          %v716 = vpop.permute.xlu0 %715
          %v718 = vmul.f32 %v692, %v716
          %720 = vrot.lane.b32.xlu0 %v712, 96
          %v721 = vpop.permute.xlu0 %720
          %723 = vst.msk [vmem:[#allocation7] sm:$0x1] %vm599, %v721
          %725 = vrot.lane.b32.xlu0 %v718, 32
          %v726 = vpop.permute.xlu0 %725
          %728 = vst.msk [vmem:[#allocation6] sm:$0x1] %vm599, %v726
          %s729 = scalar_lea.vmem [#allocation4], %s603
          %730 = vst.msk [vmem:[%s729] sm:$0x1] %vm599, %v726
        $region77: #{tpu_custom_call.1} parent=59 // loop_footer
          %s607 = sadd.s32 1, %s603
        $region78: #{tpu_custom_call.1} parent=59 // loop_footer_branch
          %602 = sbr.rel target = $region74
        $region79: #{tpu_custom_call.1} parent=59 // loop_exit
          _
        %v731 = vld [vmem:[%s5] sm:$0xff]
        %v732 = vld [vmem:[%s5 + $0x8] sm:$0xff]
        %v733 = vld [vmem:[%s5 + $0x10] sm:$0xff]
        %v734 = vld [vmem:[%s5 + $0x18] sm:$0xff]
        %735 = vst.msk [vmem:[#allocation6] sm:$0x1] %vm599, 0.0
        %736 = vst.msk [vmem:[#allocation7] sm:$0x1] %vm599, 0.0
        loop: start=0, step=1, limit=8
        $region80: #{tpu_custom_call.1} parent=59 // loop_pre_header
          _
        $region81: #{tpu_custom_call.1} parent=59 // loop_header
          %s738 = sphi 0, %s742
          %p739 = scmp.ge.s32.totalorder %s738, 8
        $region82: #{tpu_custom_call.1} parent=59 // loop_header_branch
          %741 = sbr.rel (%p739) target = $region86
        $region83: #{tpu_custom_call.1} parent=59 // loop_body
          %s743 = ssub.s32 7, %s738
          %v744 = vld [vmem:[#allocation6] sm:$0x1]
          %v745 = vld [vmem:[#allocation7] sm:$0x1]
          %s746 = scalar_lea.vmem [#allocation3], %s743
          %v747 = vld [vmem:[%s746] sm:$0x1]
          %vm748 = vcmask 261120
          %v750 = vsel %vm748, %v744, 0
          %752 = vmatprep.subr.mxu0 0.0
          %753 = vmatpush1.msra.mxu0 %v731
          %754 = vmatprep.subr.mxu0 0.0
          %755 = vmatpush1.msra.mxu0 %v732
          %756 = vmatprep.subr.mxu0 0.0
          %757 = vmatpush1.msra.mxu0 %v733
          %758 = vmatprep.subr.mxu0 0.0
          %759 = vmatpush1.msra.mxu0 %v734
          %760 = vmatprep.subr.mxu0 0.0
          %761 = vmatpush1.msra.mxu0 0.0
          %762 = vmatprep.subr.mxu0 0.0
          %763 = vmatpush1.msra.mxu0 0.0
          %764 = vmatprep.subr.mxu0 0.0
          %765 = vmatpush1.msra.mxu0 0.0
          %766 = vmatprep.subr.mxu0 0.0
          %767 = vmatpush1.msra.mxu0 0.0
          %768 = vmatprep.subr.mxu0 0.0
          %769 = vmatpush1.msra.mxu0 0.0
          %770 = vmatprep.subr.mxu0 0.0
          %771 = vmatpush1.msra.mxu0 0.0
          %772 = vmatprep.subr.mxu0 0.0
          %773 = vmatpush1.msra.mxu0 0.0
          %774 = vmatprep.subr.mxu0 0.0
          %775 = vmatpush1.msra.mxu0 0.0
          %776 = vmatprep.subr.mxu0 0.0
          %777 = vmatpush1.msra.mxu0 0.0
          %778 = vmatprep.subr.mxu0 0.0
          %779 = vmatpush1.msra.mxu0 0.0
          %780 = vmatprep.subr.mxu0 0.0
          %781 = vmatpush1.msra.mxu0 0.0
          %782 = vmatprep.subr.mxu0 0.0
          %783 = vmatpush1.msra.mxu0 0.0
          %784 = vmatprep.subr.mxu0 0.0
          %785 = vmatpush1.msra.mxu0 0.0
          %786 = vmatprep.subr.mxu0 0.0
          %787 = vmatpush1.msra.mxu0 0.0
          %788 = vmatprep.subr.mxu0 0.0
          %789 = vmatpush1.msra.mxu0 0.0
          %790 = vmatprep.subr.mxu0 0.0
          %791 = vmatpush1.msra.mxu0 0.0
          %792 = vmatprep.subr.mxu0 0.0
          %793 = vmatpush1.msra.mxu0 0.0
          %794 = vmatprep.subr.mxu0 0.0
          %795 = vmatpush1.msra.mxu0 0.0
          %796 = vmatprep.subr.mxu0 0.0
          %797 = vmatpush1.msra.mxu0 0.0
          %798 = vmatprep.subr.mxu0 0.0
          %799 = vmatpush1.msra.mxu0 0.0
          %800 = vmatprep.subr.mxu0 0.0
          %801 = vmatpush1.msra.mxu0 0.0
          %802 = vmatprep.subr.mxu0 0.0
          %803 = vmatpush1.msra.mxu0 0.0
          %804 = vmatprep.subr.mxu0 0.0
          %805 = vmatpush1.msra.mxu0 0.0
          %806 = vmatprep.subr.mxu0 0.0
          %807 = vmatpush1.msra.mxu0 0.0
          %808 = vmatprep.subr.mxu0 0.0
          %809 = vmatpush1.msra.mxu0 0.0
          %810 = vmatprep.subr.mxu0 0.0
          %811 = vmatpush1.msra.mxu0 0.0
          %812 = vmatprep.subr.mxu0 0.0
          %813 = vmatpush1.msra.mxu0 0.0
          %814 = vmatprep.subr.mxu0 0.0
          %815 = vmatpush1.msra.mxu0 0.0
          %816 = vmatprep.mubr.f32.mxu0 0.0
          %817 = vmatmul.mubr.f32.gmra.mrb[0].mxu0 %v750
          %v818 = vpop.f32.mrb[0].mxu0
          %v819 = vadd.f32 0.0, %v818
          %v820 = vpop.f32.mrb[0].mxu0
          %821 = vdwg.mxu0
          %v822 = vadd.f32 %v747, %v819
          %v823 = vsub.f32 0.0, %v822
          %v824 = vmul.f32 %v823, 1.442695
          %v825 = vpow.pop %v824
          %v826 = vadd.f32 %v825, 1.0
          %v827 = vrcp.pop %v826
          %v828 = vmul.f32 1.0, %v827
          %v829 = vtanh.pop %v822
          %v831 = vlaneseq
          %v832 = vshrl.u32 %v831, 7
          %v833 = vsub.s32 0, %v832
          %v834 = vrot.slane %v745, %v833
          %835 = vrot.lane.b32.xlu0 %v834, 32
          %v836 = vpop.permute.xlu0 %835
          %v838 = vmul.f32 %v828, %v836
          %840 = vrot.lane.b32.xlu0 %v829, 64
          %v841 = vpop.permute.xlu0 %840
          %v843 = vmul.f32 %v828, %v841
          %845 = vrot.lane.b32.xlu0 %v843, 32
          %v846 = vpop.permute.xlu0 %845
          %v848 = vadd.f32 %v838, %v846
          %v849 = vtanh.pop %v848
          %851 = vrot.lane.b32.xlu0 %v849, 64
          %v852 = vpop.permute.xlu0 %851
          %v854 = vmul.f32 %v828, %v852
          %856 = vrot.lane.b32.xlu0 %v848, 96
          %v857 = vpop.permute.xlu0 %856
          %859 = vst.msk [vmem:[#allocation7] sm:$0x1] %vm599, %v857
          %861 = vrot.lane.b32.xlu0 %v854, 32
          %v862 = vpop.permute.xlu0 %861
          %864 = vst.msk [vmem:[#allocation6] sm:$0x1] %vm599, %v862
          %s865 = scalar_lea.vmem [#allocation5], %s743
          %866 = vst.msk [vmem:[%s865] sm:$0x1] %vm599, %v862
        $region84: #{tpu_custom_call.1} parent=59 // loop_footer
          %s742 = sadd.s32 1, %s738
        $region85: #{tpu_custom_call.1} parent=59 // loop_footer_branch
          %737 = sbr.rel target = $region81
        $region86: #{tpu_custom_call.1} parent=59 // loop_exit
          _
        %v867 = vld [vmem:[#allocation4] sm:$0xff]
        %v868 = vld [vmem:[%s7] sm:$0xff]
        %v869 = vld [vmem:[%s7 + $0x8] sm:$0xff]
        %v870 = vld [vmem:[%s7 + $0x10] sm:$0xff]
        %v871 = vld [vmem:[%s7 + $0x18] sm:$0xff]
        %v872 = vld [vmem:[#allocation5] sm:$0xff]
        %v873 = vld [vmem:[%s8] sm:$0xff]
        %v874 = vld [vmem:[%s8 + $0x8] sm:$0xff]
        %v875 = vld [vmem:[%s8 + $0x10] sm:$0xff]
        %v876 = vld [vmem:[%s8 + $0x18] sm:$0xff]
        %vm877 = vcmask 261120
        %v879 = vsel %vm877, %v872, 0
        %881 = vmatprep.subr.mxu0 0.0
        %882 = vmatpush1.msra.mxu0 %v873
        %883 = vmatprep.subr.mxu0 0.0
        %884 = vmatpush1.msra.mxu0 %v874
        %885 = vmatprep.subr.mxu0 0.0
        %886 = vmatpush1.msra.mxu0 %v875
        %887 = vmatprep.subr.mxu0 0.0
        %888 = vmatpush1.msra.mxu0 %v876
        %889 = vmatprep.subr.mxu0 0.0
        %890 = vmatpush1.msra.mxu0 0.0
        %891 = vmatprep.subr.mxu0 0.0
        %892 = vmatpush1.msra.mxu0 0.0
        %893 = vmatprep.subr.mxu0 0.0
        %894 = vmatpush1.msra.mxu0 0.0
        %895 = vmatprep.subr.mxu0 0.0
        %896 = vmatpush1.msra.mxu0 0.0
        %897 = vmatprep.subr.mxu0 0.0
        %898 = vmatpush1.msra.mxu0 0.0
        %899 = vmatprep.subr.mxu0 0.0
        %900 = vmatpush1.msra.mxu0 0.0
        %901 = vmatprep.subr.mxu0 0.0
        %902 = vmatpush1.msra.mxu0 0.0
        %903 = vmatprep.subr.mxu0 0.0
        %904 = vmatpush1.msra.mxu0 0.0
        %905 = vmatprep.subr.mxu0 0.0
        %906 = vmatpush1.msra.mxu0 0.0
        %907 = vmatprep.subr.mxu0 0.0
        %908 = vmatpush1.msra.mxu0 0.0
        %909 = vmatprep.subr.mxu0 0.0
        %910 = vmatpush1.msra.mxu0 0.0
        %911 = vmatprep.subr.mxu0 0.0
        %912 = vmatpush1.msra.mxu0 0.0
        %913 = vmatprep.subr.mxu0 0.0
        %914 = vmatpush1.msra.mxu0 0.0
        %915 = vmatprep.subr.mxu0 0.0
        %916 = vmatpush1.msra.mxu0 0.0
        %917 = vmatprep.subr.mxu0 0.0
        %918 = vmatpush1.msra.mxu0 0.0
        %919 = vmatprep.subr.mxu0 0.0
        %920 = vmatpush1.msra.mxu0 0.0
        %921 = vmatprep.subr.mxu0 0.0
        %922 = vmatpush1.msra.mxu0 0.0
        %923 = vmatprep.subr.mxu0 0.0
        %924 = vmatpush1.msra.mxu0 0.0
        %925 = vmatprep.subr.mxu0 0.0
        %926 = vmatpush1.msra.mxu0 0.0
        %927 = vmatprep.subr.mxu0 0.0
        %928 = vmatpush1.msra.mxu0 0.0
        %929 = vmatprep.subr.mxu0 0.0
        %930 = vmatpush1.msra.mxu0 0.0
        %931 = vmatprep.subr.mxu0 0.0
        %932 = vmatpush1.msra.mxu0 0.0
        %933 = vmatprep.subr.mxu0 0.0
        %934 = vmatpush1.msra.mxu0 0.0
        %935 = vmatprep.subr.mxu0 0.0
        %936 = vmatpush1.msra.mxu0 0.0
        %937 = vmatprep.subr.mxu0 0.0
        %938 = vmatpush1.msra.mxu0 0.0
        %939 = vmatprep.subr.mxu0 0.0
        %940 = vmatpush1.msra.mxu0 0.0
        %941 = vmatprep.subr.mxu0 0.0
        %942 = vmatpush1.msra.mxu0 0.0
        %943 = vmatprep.subr.mxu0 0.0
        %944 = vmatpush1.msra.mxu0 0.0
        %945 = vmatprep.mubr.f32.mxu0 0.0
        %946 = vmatmul.mubr.f32.gmra.mrb[0].mxu0 %v879
        %v947 = vpop.f32.mrb[0].mxu0
        %v948 = vadd.f32 0.0, %v947
        %v949 = vpop.f32.mrb[0].mxu0
        %950 = vdwg.mxu0
        %v952 = vsel %vm877, %v867, 0
        %954 = vmatprep.subr.mxu0 0.0
        %955 = vmatpush1.msra.mxu0 %v868
        %956 = vmatprep.subr.mxu0 0.0
        %957 = vmatpush1.msra.mxu0 %v869
        %958 = vmatprep.subr.mxu0 0.0
        %959 = vmatpush1.msra.mxu0 %v870
        %960 = vmatprep.subr.mxu0 0.0
        %961 = vmatpush1.msra.mxu0 %v871
        %962 = vmatprep.subr.mxu0 0.0
        %963 = vmatpush1.msra.mxu0 0.0
        %964 = vmatprep.subr.mxu0 0.0
        %965 = vmatpush1.msra.mxu0 0.0
        %966 = vmatprep.subr.mxu0 0.0
        %967 = vmatpush1.msra.mxu0 0.0
        %968 = vmatprep.subr.mxu0 0.0
        %969 = vmatpush1.msra.mxu0 0.0
        %970 = vmatprep.subr.mxu0 0.0
        %971 = vmatpush1.msra.mxu0 0.0
        %972 = vmatprep.subr.mxu0 0.0
        %973 = vmatpush1.msra.mxu0 0.0
        %974 = vmatprep.subr.mxu0 0.0
        %975 = vmatpush1.msra.mxu0 0.0
        %976 = vmatprep.subr.mxu0 0.0
        %977 = vmatpush1.msra.mxu0 0.0
        %978 = vmatprep.subr.mxu0 0.0
        %979 = vmatpush1.msra.mxu0 0.0
        %980 = vmatprep.subr.mxu0 0.0
        %981 = vmatpush1.msra.mxu0 0.0
        %982 = vmatprep.subr.mxu0 0.0
        %983 = vmatpush1.msra.mxu0 0.0
        %984 = vmatprep.subr.mxu0 0.0
        %985 = vmatpush1.msra.mxu0 0.0
        %986 = vmatprep.subr.mxu0 0.0
        %987 = vmatpush1.msra.mxu0 0.0
        %988 = vmatprep.subr.mxu0 0.0
        %989 = vmatpush1.msra.mxu0 0.0
        %990 = vmatprep.subr.mxu0 0.0
        %991 = vmatpush1.msra.mxu0 0.0
        %992 = vmatprep.subr.mxu0 0.0
        %993 = vmatpush1.msra.mxu0 0.0
        %994 = vmatprep.subr.mxu0 0.0
        %995 = vmatpush1.msra.mxu0 0.0
        %996 = vmatprep.subr.mxu0 0.0
        %997 = vmatpush1.msra.mxu0 0.0
        %998 = vmatprep.subr.mxu0 0.0
        %999 = vmatpush1.msra.mxu0 0.0
        %1000 = vmatprep.subr.mxu0 0.0
        %1001 = vmatpush1.msra.mxu0 0.0
        %1002 = vmatprep.subr.mxu0 0.0
        %1003 = vmatpush1.msra.mxu0 0.0
        %1004 = vmatprep.subr.mxu0 0.0
        %1005 = vmatpush1.msra.mxu0 0.0
        %1006 = vmatprep.subr.mxu0 0.0
        %1007 = vmatpush1.msra.mxu0 0.0
        %1008 = vmatprep.subr.mxu0 0.0
        %1009 = vmatpush1.msra.mxu0 0.0
        %1010 = vmatprep.subr.mxu0 0.0
        %1011 = vmatpush1.msra.mxu0 0.0
        %1012 = vmatprep.subr.mxu0 0.0
        %1013 = vmatpush1.msra.mxu0 0.0
        %1014 = vmatprep.subr.mxu0 0.0
        %1015 = vmatpush1.msra.mxu0 0.0
        %1016 = vmatprep.subr.mxu0 0.0
        %1017 = vmatpush1.msra.mxu0 0.0
        %1018 = vmatprep.mubr.f32.mxu0 0.0
        %1019 = vmatmul.mubr.f32.gmra.mrb[0].mxu0 %v952
        %v1020 = vpop.f32.mrb[0].mxu0
        %v1021 = vadd.f32 %v948, %v1020
        %v1022 = vpop.f32.mrb[0].mxu0
        %1023 = vdwg.mxu0
        %v1024 = vld [vmem:[#allocation8] sm:$0x1]
        %v1026 = vlaneseq
        %v1027 = vshrl.u32 %v1026, 7
        %v1028 = vsub.s32 0, %v1027
        %v1029 = vrot.slane %v1024, %v1028
        %v1031 = vadd.f32 %v1021, %v1029
        %v1032 = vsub.f32 0.0, %v1031
        %v1033 = vmul.f32 %v1032, 1.442695
        %v1034 = vpow.pop %v1033
        %v1035 = vadd.f32 %v1034, 1.0
        %v1036 = vrcp.pop %v1035
        %v1037 = vmul.f32 1.0, %v1036
        %vm1038 = vcmask 7168
        %1039 = vst.msk [vmem:[%s405] sm:$0xff] %vm1038, %v1037
        %p1040 = scmp.lt.s32.totalorder %s27, 1
        %s1041 = scalar_select %p1040, %s27, 1
        %s1042 = smul.addr %s1041, 8
        %s1043 = scalar_lea.vmem %s10, %s1042
        // Predicated region
        $region87: #{tpu_custom_call.1} parent=59 // pred_check
          %p1044 = pneg %p260
        $region88: #{tpu_custom_call.1} parent=59 // pred_check_branch
          %1046 = sbr.rel (%p1044) target = $region90
        $region89: #{tpu_custom_call.1} parent=59 // pred_region
          _
        $region90: #{tpu_custom_call.1} parent=59 // pred_fallthru
          _
      $region60: #{tpu_custom_call.1} parent=5 // pred_fallthru
        _
      %p1047 = scmp.le.s32.totalorder 2, %s22
      // Predicated region
      $region91: #{tpu_custom_call.1} parent=5 // pred_check
        %p1048 = pneg %p1047
      $region92: #{tpu_custom_call.1} parent=5 // pred_check_branch
        %1050 = sbr.rel (%p1048) target = $region94
      $region93: #{tpu_custom_call.1} parent=5 // pred_region
        %s1051 = ssub.s32 %s22, 2
        // Predicated region
        $region95: #{tpu_custom_call.1} parent=93 // pred_check
          %p1052 = pneg %p266
        $region96: #{tpu_custom_call.1} parent=93 // pred_check_branch
          %1054 = sbr.rel (%p1052) target = $region98
        $region97: #{tpu_custom_call.1} parent=93 // pred_region
          %p1055 = scmp.lt.s32.totalorder %s28, 1
          %s1056 = scalar_select %p1055, %s28, 1
          %s1057 = smul.addr %s1056, 8
          %s1058 = scalar_lea.vmem %s10, %s1057
        $region98: #{tpu_custom_call.1} parent=93 // pred_fallthru
          _
      $region94: #{tpu_custom_call.1} parent=5 // pred_fallthru
        _
    $region6: #{tpu_custom_call.1} parent=1 // loop_footer
      %s26 = sadd.s32 1, %s22
    $region7: #{tpu_custom_call.1} parent=1 // loop_footer_branch
      %21 = sbr.rel target = $region3
    $region8: #{tpu_custom_call.1} parent=1 // loop_exit
      _
    %1059 = vsyncpa [#allocation10], 1
    %s1060 = scalar_lea.sflag [#allocation10], 1
    %1061 = vsyncpa %s1060, 1
    %1062 = vsyncpa [#allocation12], 1

</llo_original>
